<compile_context>
chip_gen: v5e
topology: v5e:2x2
jax: 0.10.0
libtpu: 0.0.40
codegen_flags: <defaults>
</compile_context>

<pallas_src>
import functools

import numpy as np
import jax
import jax.numpy as jnp
from jax import lax
from jax.experimental import pallas as pl
from jax.experimental.pallas import tpu as pltpu


def _round_up(x, m):
    return ((x + m - 1) // m) * m


# ----------------------------------------------------------------------------
# Fused kernel: branch MLP + trunk MLP (row tile) + block-diagonal combine.
# ----------------------------------------------------------------------------
def _deeponet_kernel(n_branch_hidden, n_trunk_hidden, use_bf16, *refs):
    # refs = (trunk_x_tile, branch_x,
    #         bw0, bb0, ..., bw_uv, bb_uv,      # branch params (2*nbh + 2)
    #         tw0, tb0, ..., tw_uv, tb_uv,      # trunk  params (2*nth + 2)
    #         mask,                             # (2*nb_pad, P2) block-diag mask
    #         out_ref)                          # (2*nb_pad, tile_nt)
    trunk_x_ref = refs[0]
    branch_x_ref = refs[1]
    out_ref = refs[-1]
    mask_ref = refs[-2]
    params = refs[2:-2]
    bp = params[: 2 * n_branch_hidden + 2]
    tp = params[2 * n_branch_hidden + 2:]

    def mm(a, w):
        if use_bf16:
            a = a.astype(jnp.bfloat16)
            w = w.astype(jnp.bfloat16)
        return jnp.dot(a, w, preferred_element_type=jnp.float32)

    # --- branch MLP (tiny; recomputed per grid step, cheaper than an HBM
    #     round-trip and an extra launch) ------------------------------------
    hb = branch_x_ref[...]
    for i in range(n_branch_hidden):
        hb = jnp.tanh(mm(hb, bp[2 * i][...]) + bp[2 * i + 1][...])
    bo = mm(hb, bp[2 * n_branch_hidden][...]) + bp[2 * n_branch_hidden + 1][...]

    # --- trunk MLP on this row tile -----------------------------------------
    ht = trunk_x_ref[...]
    for i in range(n_trunk_hidden):
        ht = jnp.tanh(mm(ht, tp[2 * i][...]) + tp[2 * i + 1][...])
    to = mm(ht, tp[2 * n_trunk_hidden][...]) + tp[2 * n_trunk_hidden + 1][...]

    # --- combine: one dot_general against the block-diagonal branch matrix
    #     [[Bu, 0], [0, Bv]].  Contraction on dim 1 of both operands
    #     (transposed stationary RHS) -> no XLU transpose of the trunk tile.
    blk = jnp.concatenate([bo, bo], axis=0) * mask_ref[...]
    if use_bf16:
        blk = blk.astype(jnp.bfloat16)
        to = to.astype(jnp.bfloat16)
    out_ref[...] = lax.dot_general(
        blk, to, (((1,), (1,)), ((), ())), preferred_element_type=jnp.float32
    )


# ----------------------------------------------------------------------------
# Wrapper
# ----------------------------------------------------------------------------
def deeponet_forward(branch_x, trunk_x, branch_flat, trunk_flat,
                     n_branch_hidden, n_trunk_hidden, pad_u, pad_v,
                     tile_nt=4096, use_bf16=False):
    nb, nt = branch_x.shape[0], trunk_x.shape[0]
    in_t = trunk_x.shape[1]
    nb_pad = _round_up(nb, 8)
    p2 = pad_u + pad_v

    branch_x = branch_x.astype(jnp.float32)
    trunk_x = trunk_x.astype(jnp.float32)
    bx_pad = jnp.zeros((nb_pad, branch_x.shape[1]), jnp.float32).at[:nb].set(branch_x)

    # block-diagonal selection mask (trace-time constant)
    mask_np = np.zeros((2 * nb_pad, p2), np.float32)
    mask_np[:nb_pad, :pad_u] = 1.0
    mask_np[nb_pad:, pad_u:] = 1.0
    mask = jnp.asarray(mask_np)

    # Tile selection: lane-dense multiple of 128, clamped to the problem, and
    # >= 2 grid steps where possible so v7x megacore can split the tiles.
    tile_nt = max(128, _round_up(tile_nt, 128))
    nt_pad128 = _round_up(nt, 128)
    if tile_nt >= nt_pad128:
        tile_nt = _round_up((nt_pad128 + 1) // 2, 128) if nt_pad128 > 128 else 128
    grid = (pl.cdiv(nt, tile_nt),)

    resident = [bx_pad] + list(branch_flat) + list(trunk_flat) + [mask]

    in_specs = [pl.BlockSpec((tile_nt, in_t), lambda i: (i, 0))]          # streamed
    in_specs += [pl.BlockSpec(a.shape, lambda i: (0, 0)) for a in resident]  # resident
    out_specs = pl.BlockSpec((2 * nb_pad, tile_nt), lambda i: (0, i))     # lane-dense

    kernel = functools.partial(
        _deeponet_kernel, n_branch_hidden, n_trunk_hidden, use_bf16
    )
    out = pl.pallas_call(
        kernel,
        grid=grid,
        out_shape=jax.ShapeDtypeStruct((2 * nb_pad, nt), jnp.float32),
        in_specs=in_specs,
        out_specs=out_specs,
        compiler_params=pltpu.CompilerParams(
            dimension_semantics=("parallel",),
            # ~6-8 MiB live at tile_nt=4096; 48 MiB cap fits every generation
            # (v7x physical VMEM is 64 MiB per TensorCore).
            vmem_limit_bytes=48 * 1024 * 1024,
        ),
    )(trunk_x, *resident)

    u = out[:nb]
    v = out[nb_pad:nb_pad + nb]
    return u, v


# ----------------------------------------------------------------------------
# Parameter setup (mimics torch.nn.Linear default U(+-1/sqrt(fan_in)))
# ----------------------------------------------------------------------------
def init_dense_nn(key, layers):
    weights, biases = [], []
    for i in range(len(layers) - 1):
        key, kw, kb = jax.random.split(key, 3)
        bound = 1.0 / float(layers[i]) ** 0.5
        w = jax.random.uniform(
            kw, (layers[i], layers[i + 1]), jnp.float32, -bound, bound
        )
        b = jax.random.uniform(kb, (layers[i + 1],), jnp.float32, -bound, bound)
        weights.append(w)
        biases.append(b)
    return key, weights, biases


def _pack_last_layer(w, b, p):
    """Split the last Linear into u/v halves, zero-pad each half to a 128-lane
    multiple and concatenate along the lane axis -> single MXU matmul."""
    out_dim = w.shape[1]
    p_u, p_v = p, out_dim - p
    pad_u = _round_up(max(p_u, 1), 128)
    pad_v = _round_up(max(p_v, 1), 128)
    w_uv = jnp.zeros((w.shape[0], pad_u + pad_v), jnp.float32)
    w_uv = w_uv.at[:, :p_u].set(w[:, :p_u])
    w_uv = w_uv.at[:, pad_u:pad_u + p_v].set(w[:, p_u:])
    b_uv = jnp.zeros((1, pad_u + pad_v), jnp.float32)
    b_uv = b_uv.at[0, :p_u].set(b[:p_u])
    b_uv = b_uv.at[0, pad_u:pad_u + p_v].set(b[p_u:])
    return w_uv, b_uv, pad_u, pad_v


class DeepONetPallas:
    def __init__(self, key, branch_layers, trunk_layers, tile_nt=4096, use_bf16=False):
        assert branch_layers[-1] == trunk_layers[-1]
        # NOTE: matches the PyTorch module exactly: p = branch_layers[1] // 2
        self.p = branch_layers[1] // 2
        self.tile_nt = tile_nt
        self.use_bf16 = use_bf16
        key, self.bw, self.bb = init_dense_nn(key, branch_layers)
        key, self.tw, self.tb = init_dense_nn(key, trunk_layers)

        bw_uv, bb_uv, pad_u, pad_v = _pack_last_layer(self.bw[-1], self.bb[-1], self.p)
        tw_uv, tb_uv, _, _ = _pack_last_layer(self.tw[-1], self.tb[-1], self.p)
        self.pad_u, self.pad_v = pad_u, pad_v
        self.n_branch_hidden = len(self.bw) - 1
        self.n_trunk_hidden = len(self.tw) - 1

        bflat = []
        for w, b in zip(self.bw[:-1], self.bb[:-1]):
            bflat += [w, b.reshape(1, -1)]
        bflat += [bw_uv, bb_uv]
        tflat = []
        for w, b in zip(self.tw[:-1], self.tb[:-1]):
            tflat += [w, b.reshape(1, -1)]
        tflat += [tw_uv, tb_uv]
        self.branch_flat = bflat
        self.trunk_flat = tflat

    def __call__(self, branch_input, trunk_input):
        return deeponet_forward(
            branch_input, trunk_input,
            self.branch_flat, self.trunk_flat,
            self.n_branch_hidden, self.n_trunk_hidden,
            self.pad_u, self.pad_v,
            tile_nt=self.tile_nt, use_bf16=self.use_bf16,
        )


# ----------------------------------------------------------------------------
# Pure-JAX reference (explicit HIGHEST precision so the XLA reference does not
# silently downcast f32 matmuls to bf16 on TPU).
# ----------------------------------------------------------------------------
def _mlp_ref(x, ws, bs):
    h = x
    for i, (w, b) in enumerate(zip(ws, bs)):
        h = jnp.dot(h, w, precision=jax.lax.Precision.HIGHEST) + b
        if i < len(ws) - 1:
            h = jnp.tanh(h)
    return h


if __name__ == "__main__":
    branch_layers = [16, 32, 32, 32]
    trunk_layers = [2, 32, 32, 32]
    model = DeepONetPallas(jax.random.PRNGKey(0), branch_layers, trunk_layers)

    key = jax.random.PRNGKey(0)
    kb, kt = jax.random.split(key)
    nb, nt = 6, 300
    branch_input = jax.random.normal(kb, (nb, branch_layers[0]), jnp.float32)
    trunk_input = jax.random.normal(kt, (nt, trunk_layers[0]), jnp.float32)

    fwd = jax.jit(lambda b, t: model(b, t))
    u, v = fwd(branch_input, trunk_input)
    jax.block_until_ready((u, v))

    # reference check (same semantics as the PyTorch forward)
    bo = _mlp_ref(branch_input, model.bw, model.bb)
    to = _mlp_ref(trunk_input, model.tw, model.tb)
    p = model.p
    u_ref = jnp.sum(bo[:, None, :p] * to[None, :, :p], axis=2)
    v_ref = jnp.sum(bo[:, None, p:] * to[None, :, p:], axis=2)
    assert u.shape == (nb, nt) and v.shape == (nb, nt)
    assert jnp.allclose(u, u_ref, atol=1e-3, rtol=1e-3)
    assert jnp.allclose(v, v_ref, atol=1e-3, rtol=1e-3)

    print("KERNEL_OK")
</pallas_src>

<mosaic_0001>
module attributes {stable_mosaic.version = 11 : i64} {
  func.func @_deeponet_kernel(%arg0: i32, %arg1: memref<256x2xf32, #tpu.memory_space<vmem>>, %arg2: memref<8x16xf32, #tpu.memory_space<vmem>>, %arg3: memref<16x32xf32, #tpu.memory_space<vmem>>, %arg4: memref<1x32xf32, #tpu.memory_space<vmem>>, %arg5: memref<32x32xf32, #tpu.memory_space<vmem>>, %arg6: memref<1x32xf32, #tpu.memory_space<vmem>>, %arg7: memref<32x256xf32, #tpu.memory_space<vmem>>, %arg8: memref<1x256xf32, #tpu.memory_space<vmem>>, %arg9: memref<2x32xf32, #tpu.memory_space<vmem>>, %arg10: memref<1x32xf32, #tpu.memory_space<vmem>>, %arg11: memref<32x32xf32, #tpu.memory_space<vmem>>, %arg12: memref<1x32xf32, #tpu.memory_space<vmem>>, %arg13: memref<32x256xf32, #tpu.memory_space<vmem>>, %arg14: memref<1x256xf32, #tpu.memory_space<vmem>>, %arg15: memref<16x256xf32, #tpu.memory_space<vmem>>, %arg16: memref<16x256xf32, #tpu.memory_space<vmem>>) attributes {dimension_semantics = [#tpu.dimension_semantics<parallel>], iteration_bounds = array<i64: 2>, scalar_prefetch = 0 : i64, scratch_operands = 0 : i64, tpu.core_type = #tpu.core_type<tc>, window_params = [{transform_indices = @transform_0, window_bounds = array<i64: 256, 2>}, {pipeline_mode = #tpu.pipeline_mode<synchronous>, transform_indices = @transform_1, window_bounds = array<i64: 8, 16>}, {pipeline_mode = #tpu.pipeline_mode<synchronous>, transform_indices = @transform_2, window_bounds = array<i64: 16, 32>}, {pipeline_mode = #tpu.pipeline_mode<synchronous>, transform_indices = @transform_3, window_bounds = array<i64: 1, 32>}, {pipeline_mode = #tpu.pipeline_mode<synchronous>, transform_indices = @transform_4, window_bounds = array<i64: 32, 32>}, {pipeline_mode = #tpu.pipeline_mode<synchronous>, transform_indices = @transform_5, window_bounds = array<i64: 1, 32>}, {pipeline_mode = #tpu.pipeline_mode<synchronous>, transform_indices = @transform_6, window_bounds = array<i64: 32, 256>}, {pipeline_mode = #tpu.pipeline_mode<synchronous>, transform_indices = @transform_7, window_bounds = array<i64: 1, 256>}, {pipeline_mode = #tpu.pipeline_mode<synchronous>, transform_indices = @transform_8, window_bounds = array<i64: 2, 32>}, {pipeline_mode = #tpu.pipeline_mode<synchronous>, transform_indices = @transform_9, window_bounds = array<i64: 1, 32>}, {pipeline_mode = #tpu.pipeline_mode<synchronous>, transform_indices = @transform_10, window_bounds = array<i64: 32, 32>}, {pipeline_mode = #tpu.pipeline_mode<synchronous>, transform_indices = @transform_11, window_bounds = array<i64: 1, 32>}, {pipeline_mode = #tpu.pipeline_mode<synchronous>, transform_indices = @transform_12, window_bounds = array<i64: 32, 256>}, {pipeline_mode = #tpu.pipeline_mode<synchronous>, transform_indices = @transform_13, window_bounds = array<i64: 1, 256>}, {pipeline_mode = #tpu.pipeline_mode<synchronous>, transform_indices = @transform_14, window_bounds = array<i64: 16, 256>}, {transform_indices = @transform_15, window_bounds = array<i64: 16, 256>}]} {
    %c0 = arith.constant 0 : index
    %c0_0 = arith.constant 0 : index
    %0 = vector.load %arg2[%c0, %c0_0] : memref<8x16xf32, #tpu.memory_space<vmem>>, vector<8x16xf32>
    %c0_1 = arith.constant 0 : index
    %c0_2 = arith.constant 0 : index
    %1 = vector.load %arg3[%c0_1, %c0_2] : memref<16x32xf32, #tpu.memory_space<vmem>>, vector<16x32xf32>
    %cst = arith.constant dense<0.000000e+00> : vector<8x32xf32>
    %2 = tpu.matmul %0, %1, %cst {dimension_numbers = #tpu.dot_dimension_numbers<[1], [0], [0], [1], [0, 0, 1, 1], [], []>} : vector<8x16xf32>, vector<16x32xf32>, vector<8x32xf32> -> vector<8x32xf32>
    %c0_3 = arith.constant 0 : index
    %c0_4 = arith.constant 0 : index
    %3 = vector.load %arg4[%c0_3, %c0_4] : memref<1x32xf32, #tpu.memory_space<vmem>>, vector<1x32xf32>
    %4 = vector.broadcast %3 : vector<1x32xf32> to vector<8x32xf32>
    %5 = arith.addf %2, %4 : vector<8x32xf32>
    %6 = math.tanh %5 : vector<8x32xf32>
    %c0_5 = arith.constant 0 : index
    %c0_6 = arith.constant 0 : index
    %7 = vector.load %arg5[%c0_5, %c0_6] : memref<32x32xf32, #tpu.memory_space<vmem>>, vector<32x32xf32>
    %cst_7 = arith.constant dense<0.000000e+00> : vector<8x32xf32>
    %8 = tpu.matmul %6, %7, %cst_7 {dimension_numbers = #tpu.dot_dimension_numbers<[1], [0], [0], [1], [0, 0, 1, 1], [], []>} : vector<8x32xf32>, vector<32x32xf32>, vector<8x32xf32> -> vector<8x32xf32>
    %c0_8 = arith.constant 0 : index
    %c0_9 = arith.constant 0 : index
    %9 = vector.load %arg6[%c0_8, %c0_9] : memref<1x32xf32, #tpu.memory_space<vmem>>, vector<1x32xf32>
    %10 = vector.broadcast %9 : vector<1x32xf32> to vector<8x32xf32>
    %11 = arith.addf %8, %10 : vector<8x32xf32>
    %12 = math.tanh %11 : vector<8x32xf32>
    %c0_10 = arith.constant 0 : index
    %c0_11 = arith.constant 0 : index
    %13 = vector.load %arg7[%c0_10, %c0_11] : memref<32x256xf32, #tpu.memory_space<vmem>>, vector<32x256xf32>
    %cst_12 = arith.constant dense<0.000000e+00> : vector<8x256xf32>
    %14 = tpu.matmul %12, %13, %cst_12 {dimension_numbers = #tpu.dot_dimension_numbers<[1], [0], [0], [1], [0, 0, 1, 1], [], []>} : vector<8x32xf32>, vector<32x256xf32>, vector<8x256xf32> -> vector<8x256xf32>
    %c0_13 = arith.constant 0 : index
    %c0_14 = arith.constant 0 : index
    %15 = vector.load %arg8[%c0_13, %c0_14] : memref<1x256xf32, #tpu.memory_space<vmem>>, vector<1x256xf32>
    %16 = vector.broadcast %15 : vector<1x256xf32> to vector<8x256xf32>
    %17 = arith.addf %14, %16 : vector<8x256xf32>
    %c0_15 = arith.constant 0 : index
    %c0_16 = arith.constant 0 : index
    %18 = vector.load %arg1[%c0_15, %c0_16] : memref<256x2xf32, #tpu.memory_space<vmem>>, vector<256x2xf32>
    %c0_17 = arith.constant 0 : index
    %c0_18 = arith.constant 0 : index
    %19 = vector.load %arg9[%c0_17, %c0_18] : memref<2x32xf32, #tpu.memory_space<vmem>>, vector<2x32xf32>
    %cst_19 = arith.constant dense<0.000000e+00> : vector<256x32xf32>
    %20 = tpu.matmul %18, %19, %cst_19 {dimension_numbers = #tpu.dot_dimension_numbers<[1], [0], [0], [1], [0, 0, 1, 1], [], []>} : vector<256x2xf32>, vector<2x32xf32>, vector<256x32xf32> -> vector<256x32xf32>
    %c0_20 = arith.constant 0 : index
    %c0_21 = arith.constant 0 : index
    %21 = vector.load %arg10[%c0_20, %c0_21] : memref<1x32xf32, #tpu.memory_space<vmem>>, vector<1x32xf32>
    %22 = vector.broadcast %21 : vector<1x32xf32> to vector<256x32xf32>
    %23 = arith.addf %20, %22 : vector<256x32xf32>
    %24 = math.tanh %23 : vector<256x32xf32>
    %c0_22 = arith.constant 0 : index
    %c0_23 = arith.constant 0 : index
    %25 = vector.load %arg11[%c0_22, %c0_23] : memref<32x32xf32, #tpu.memory_space<vmem>>, vector<32x32xf32>
    %cst_24 = arith.constant dense<0.000000e+00> : vector<256x32xf32>
    %26 = tpu.matmul %24, %25, %cst_24 {dimension_numbers = #tpu.dot_dimension_numbers<[1], [0], [0], [1], [0, 0, 1, 1], [], []>} : vector<256x32xf32>, vector<32x32xf32>, vector<256x32xf32> -> vector<256x32xf32>
    %c0_25 = arith.constant 0 : index
    %c0_26 = arith.constant 0 : index
    %27 = vector.load %arg12[%c0_25, %c0_26] : memref<1x32xf32, #tpu.memory_space<vmem>>, vector<1x32xf32>
    %28 = vector.broadcast %27 : vector<1x32xf32> to vector<256x32xf32>
    %29 = arith.addf %26, %28 : vector<256x32xf32>
    %30 = math.tanh %29 : vector<256x32xf32>
    %c0_27 = arith.constant 0 : index
    %c0_28 = arith.constant 0 : index
    %31 = vector.load %arg13[%c0_27, %c0_28] : memref<32x256xf32, #tpu.memory_space<vmem>>, vector<32x256xf32>
    %cst_29 = arith.constant dense<0.000000e+00> : vector<256x256xf32>
    %32 = tpu.matmul %30, %31, %cst_29 {dimension_numbers = #tpu.dot_dimension_numbers<[1], [0], [0], [1], [0, 0, 1, 1], [], []>} : vector<256x32xf32>, vector<32x256xf32>, vector<256x256xf32> -> vector<256x256xf32>
    %c0_30 = arith.constant 0 : index
    %c0_31 = arith.constant 0 : index
    %33 = vector.load %arg14[%c0_30, %c0_31] : memref<1x256xf32, #tpu.memory_space<vmem>>, vector<1x256xf32>
    %34 = vector.broadcast %33 : vector<1x256xf32> to vector<256x256xf32>
    %35 = arith.addf %32, %34 : vector<256x256xf32>
    %36 = tpu.concatenate %17, %17 in 0 : vector<8x256xf32>, vector<8x256xf32> -> vector<16x256xf32>
    %c0_32 = arith.constant 0 : index
    %c0_33 = arith.constant 0 : index
    %37 = vector.load %arg15[%c0_32, %c0_33] : memref<16x256xf32, #tpu.memory_space<vmem>>, vector<16x256xf32>
    %38 = arith.mulf %36, %37 : vector<16x256xf32>
    %cst_34 = arith.constant dense<0.000000e+00> : vector<16x256xf32>
    %39 = tpu.matmul %38, %35, %cst_34 {dimension_numbers = #tpu.dot_dimension_numbers<[1], [1], [0], [0], [0, 0, 1, 0], [], []>} : vector<16x256xf32>, vector<256x256xf32>, vector<16x256xf32> -> vector<16x256xf32>
    %c0_35 = arith.constant 0 : index
    %c0_36 = arith.constant 0 : index
    %40 = vector.load %arg16[%c0_35, %c0_36] : memref<16x256xf32, #tpu.memory_space<vmem>>, vector<16x256xf32>
    tpu.vector_store %arg16[%c0_35, %c0_36], %39 {strides = array<i32>} : memref<16x256xf32, #tpu.memory_space<vmem>>, vector<16x256xf32>,
    return
  }
  func.func @transform_0(%arg0: i32) -> (i32, i32) {
    %c0_i32 = arith.constant 0 : i32
    %c0_i32_0 = arith.constant 0 : i32
    return %arg0, %c0_i32 : i32, i32
  }
  func.func @transform_1(%arg0: i32) -> (i32, i32) {
    %c0_i32 = arith.constant 0 : i32
    %c0_i32_0 = arith.constant 0 : i32
    %c0_i32_1 = arith.constant 0 : i32
    return %c0_i32, %c0_i32_0 : i32, i32
  }
  func.func @transform_2(%arg0: i32) -> (i32, i32) {
    %c0_i32 = arith.constant 0 : i32
    %c0_i32_0 = arith.constant 0 : i32
    %c0_i32_1 = arith.constant 0 : i32
    return %c0_i32, %c0_i32_0 : i32, i32
  }
  func.func @transform_3(%arg0: i32) -> (i32, i32) {
    %c0_i32 = arith.constant 0 : i32
    %c0_i32_0 = arith.constant 0 : i32
    %c0_i32_1 = arith.constant 0 : i32
    return %c0_i32, %c0_i32_0 : i32, i32
  }
  func.func @transform_4(%arg0: i32) -> (i32, i32) {
    %c0_i32 = arith.constant 0 : i32
    %c0_i32_0 = arith.constant 0 : i32
    %c0_i32_1 = arith.constant 0 : i32
    return %c0_i32, %c0_i32_0 : i32, i32
  }
  func.func @transform_5(%arg0: i32) -> (i32, i32) {
    %c0_i32 = arith.constant 0 : i32
    %c0_i32_0 = arith.constant 0 : i32
    %c0_i32_1 = arith.constant 0 : i32
    return %c0_i32, %c0_i32_0 : i32, i32
  }
  func.func @transform_6(%arg0: i32) -> (i32, i32) {
    %c0_i32 = arith.constant 0 : i32
    %c0_i32_0 = arith.constant 0 : i32
    %c0_i32_1 = arith.constant 0 : i32
    return %c0_i32, %c0_i32_0 : i32, i32
  }
  func.func @transform_7(%arg0: i32) -> (i32, i32) {
    %c0_i32 = arith.constant 0 : i32
    %c0_i32_0 = arith.constant 0 : i32
    %c0_i32_1 = arith.constant 0 : i32
    return %c0_i32, %c0_i32_0 : i32, i32
  }
  func.func @transform_8(%arg0: i32) -> (i32, i32) {
    %c0_i32 = arith.constant 0 : i32
    %c0_i32_0 = arith.constant 0 : i32
    %c0_i32_1 = arith.constant 0 : i32
    return %c0_i32, %c0_i32_0 : i32, i32
  }
  func.func @transform_9(%arg0: i32) -> (i32, i32) {
    %c0_i32 = arith.constant 0 : i32
    %c0_i32_0 = arith.constant 0 : i32
    %c0_i32_1 = arith.constant 0 : i32
    return %c0_i32, %c0_i32_0 : i32, i32
  }
  func.func @transform_10(%arg0: i32) -> (i32, i32) {
    %c0_i32 = arith.constant 0 : i32
    %c0_i32_0 = arith.constant 0 : i32
    %c0_i32_1 = arith.constant 0 : i32
    return %c0_i32, %c0_i32_0 : i32, i32
  }
  func.func @transform_11(%arg0: i32) -> (i32, i32) {
    %c0_i32 = arith.constant 0 : i32
    %c0_i32_0 = arith.constant 0 : i32
    %c0_i32_1 = arith.constant 0 : i32
    return %c0_i32, %c0_i32_0 : i32, i32
  }
  func.func @transform_12(%arg0: i32) -> (i32, i32) {
    %c0_i32 = arith.constant 0 : i32
    %c0_i32_0 = arith.constant 0 : i32
    %c0_i32_1 = arith.constant 0 : i32
    return %c0_i32, %c0_i32_0 : i32, i32
  }
  func.func @transform_13(%arg0: i32) -> (i32, i32) {
    %c0_i32 = arith.constant 0 : i32
    %c0_i32_0 = arith.constant 0 : i32
    %c0_i32_1 = arith.constant 0 : i32
    return %c0_i32, %c0_i32_0 : i32, i32
  }
  func.func @transform_14(%arg0: i32) -> (i32, i32) {
    %c0_i32 = arith.constant 0 : i32
    %c0_i32_0 = arith.constant 0 : i32
    %c0_i32_1 = arith.constant 0 : i32
    return %c0_i32, %c0_i32_0 : i32, i32
  }
  func.func @transform_15(%arg0: i32) -> (i32, i32) {
    %c0_i32 = arith.constant 0 : i32
    %c0_i32_0 = arith.constant 0 : i32
    return %c0_i32, %arg0 : i32, i32
  }
}

</mosaic_0001>

<llo_original>
// kernel: _lambda_.1
$region0: #{_lambda_.1}
  #allocation0 [shape = 'u32[]', space=smem, size = 0x4, offset = 0x4, fixed_abs, tag = 'smem constant byte address 0x4 - core index']
  #allocation1 [shape = 'u32[72,128]{1,0:T(1,128)}', space=vmem, size = 0x9000, scoped, tag = 'internal scratch']
  %s0 = inlined_call_operand.vmem [shape: f32[300,2], index: 0, kind: input, shape index: {}]
  %s1 = inlined_call_operand.vmem [shape: f32[8,16], index: 1, kind: input, shape index: {}]
  %s2 = inlined_call_operand.vmem [shape: f32[16,32], index: 2, kind: input, shape index: {}]
  %s3 = inlined_call_operand.vmem [shape: f32[1,32], index: 3, kind: input, shape index: {}]
  %s4 = inlined_call_operand.vmem [shape: f32[32,32], index: 4, kind: input, shape index: {}]
  %s5 = inlined_call_operand.vmem [shape: f32[1,32], index: 5, kind: input, shape index: {}]
  %s6 = inlined_call_operand.vmem [shape: f32[32,256], index: 6, kind: input, shape index: {}]
  %s7 = inlined_call_operand.vmem [shape: f32[1,256], index: 7, kind: input, shape index: {}]
  %s8 = inlined_call_operand.vmem [shape: f32[2,32], index: 8, kind: input, shape index: {}]
  %s9 = inlined_call_operand.vmem [shape: f32[1,32], index: 9, kind: input, shape index: {}]
  %s10 = inlined_call_operand.vmem [shape: f32[32,32], index: 10, kind: input, shape index: {}]
  %s11 = inlined_call_operand.vmem [shape: f32[1,32], index: 11, kind: input, shape index: {}]
  %s12 = inlined_call_operand.vmem [shape: f32[32,256], index: 12, kind: input, shape index: {}]
  %s13 = inlined_call_operand.vmem [shape: f32[1,256], index: 13, kind: input, shape index: {}]
  %s14 = inlined_call_operand.vmem [shape: f32[16,256], index: 14, kind: input, shape index: {}]
  %s15 = inlined_call_operand.vmem [shape: f32[16,300], index: 15, kind: output, shape index: {}]
  %s16 = sld [smem:[#allocation0]]
  $region155: #{_lambda_.1} parent=0
    _
  %s18 = ssub.s32 1, %s16
  %s19 = scalar_select 0, %s18, %s16
  $region1: #{_lambda_.1} parent=0
    #allocation2 [shape = 'u8[32768]{0}', space=vmem, size = 0x8000, scoped, tag = 'output window, operand 0']
    loop: start=0, step=1, limit=4
    $region2: #{_lambda_.1} parent=1 // loop_pre_header
      _
    $region3: #{_lambda_.1} parent=1 // loop_header
      %s21 = sphi 0, %s25
      %p22 = scmp.ge.s32.totalorder %s21, 4
      %s31 = sphi 0, %s33
      %s34 = sphi 0, %s31
      %s35 = sphi 0, %s34
      %s51 = sphi 0, %s35
      %s55 = sphi 0, %s55
      %s57 = sphi 0, %s55
      %s58 = sphi 0, %s57
      %s72 = sphi 0, %s58
      %s76 = sphi 0, %s76
      %s78 = sphi 0, %s76
      %s79 = sphi 0, %s78
      %s93 = sphi 0, %s79
      %s97 = sphi 0, %s97
      %s99 = sphi 0, %s97
      %s100 = sphi 0, %s99
      %s114 = sphi 0, %s100
      %s118 = sphi 0, %s118
      %s120 = sphi 0, %s118
      %s121 = sphi 0, %s120
      %s135 = sphi 0, %s121
      %s139 = sphi 0, %s139
      %s141 = sphi 0, %s139
      %s142 = sphi 0, %s141
      %s156 = sphi 0, %s142
      %s160 = sphi 0, %s160
      %s162 = sphi 0, %s160
      %s163 = sphi 0, %s162
      %s177 = sphi 0, %s163
      %s181 = sphi 0, %s181
      %s183 = sphi 0, %s181
      %s184 = sphi 0, %s183
      %s198 = sphi 0, %s184
      %s202 = sphi 0, %s202
      %s204 = sphi 0, %s202
      %s205 = sphi 0, %s204
      %s219 = sphi 0, %s205
      %s223 = sphi 0, %s223
      %s225 = sphi 0, %s223
      %s226 = sphi 0, %s225
      %s240 = sphi 0, %s226
      %s244 = sphi 0, %s244
      %s246 = sphi 0, %s244
      %s247 = sphi 0, %s246
      %s261 = sphi 0, %s247
      %s265 = sphi 0, %s265
      %s267 = sphi 0, %s265
      %s268 = sphi 0, %s267
      %s282 = sphi 0, %s268
      %s286 = sphi 0, %s286
      %s288 = sphi 0, %s286
      %s289 = sphi 0, %s288
      %s303 = sphi 0, %s289
      %s307 = sphi 0, %s307
      %s309 = sphi 0, %s307
      %s310 = sphi 0, %s309
      %s324 = sphi 0, %s310
      %s328 = sphi 0, %s328
      %s330 = sphi 0, %s328
      %s331 = sphi 0, %s330
      %s345 = sphi 0, %s331
      %s351 = sphi 0, %s353
      %s354 = sphi 0, %s351
      %s355 = sphi 0, %s354
      %s371 = sphi 0, %s355
    $region4: #{_lambda_.1} parent=1 // loop_header_branch
      %24 = sbr.rel (%p22) target = $region8
    $region5: #{_lambda_.1} parent=1 // loop_body
      %s26 = ssub.s32 %s21, 1
      %s27 = ssub.s32 %s21, 2
      %s28 = sadd.s32 %s21, 1
      %s29 = ssub.s32 %s21, %s28
      %p30 = scmp.eq.s32.totalorder %s29, 0
      %s32 = sadd.s32 %s31, 1
      %s33 = scalar_select %p30, %s31, %s32
      %p36 = pneg %p30
      %p37 = scmp.eq.s32.totalorder %s21, 1
      %p38 = por %p36, %p37
      %p39 = scmp.ne.s32.totalorder %s31, %s34
      %p40 = scmp.eq.s32.totalorder %s21, 0
      %p41 = por %p39, %p40
      %p42 = scmp.ne.s32.totalorder %s31, %s34
      %p43 = scmp.eq.s32.totalorder %s26, 1
      %p44 = por %p42, %p43
      %p45 = scmp.ne.s32.totalorder %s34, %s35
      %p46 = scmp.eq.s32.totalorder %s26, 0
      %p47 = por %p45, %p46
      %p48 = scmp.ne.s32.totalorder %s34, %s35
      %p49 = scmp.eq.s32.totalorder %s27, 1
      %p50 = por %p48, %p49
      %p52 = scmp.ne.s32.totalorder %s35, %s51
      %p53 = scmp.eq.s32.totalorder %s27, 0
      %p54 = por %p52, %p53
      %s56 = sadd.s32 %s55, 1
      %p59 = scmp.eq.s32.totalorder %s21, 1
      %p60 = scmp.ne.s32.totalorder %s55, %s57
      %p61 = scmp.eq.s32.totalorder %s21, 0
      %p62 = por %p60, %p61
      %p63 = scmp.ne.s32.totalorder %s55, %s57
      %p64 = scmp.eq.s32.totalorder %s26, 1
      %p65 = por %p63, %p64
      %p66 = scmp.ne.s32.totalorder %s57, %s58
      %p67 = scmp.eq.s32.totalorder %s26, 0
      %p68 = por %p66, %p67
      %p69 = scmp.ne.s32.totalorder %s57, %s58
      %p70 = scmp.eq.s32.totalorder %s27, 1
      %p71 = por %p69, %p70
      %p73 = scmp.ne.s32.totalorder %s58, %s72
      %p74 = scmp.eq.s32.totalorder %s27, 0
      %p75 = por %p73, %p74
      %s77 = sadd.s32 %s76, 1
      %p80 = scmp.eq.s32.totalorder %s21, 1
      %p81 = scmp.ne.s32.totalorder %s76, %s78
      %p82 = scmp.eq.s32.totalorder %s21, 0
      %p83 = por %p81, %p82
      %p84 = scmp.ne.s32.totalorder %s76, %s78
      %p85 = scmp.eq.s32.totalorder %s26, 1
      %p86 = por %p84, %p85
      %p87 = scmp.ne.s32.totalorder %s78, %s79
      %p88 = scmp.eq.s32.totalorder %s26, 0
      %p89 = por %p87, %p88
      %p90 = scmp.ne.s32.totalorder %s78, %s79
      %p91 = scmp.eq.s32.totalorder %s27, 1
      %p92 = por %p90, %p91
      %p94 = scmp.ne.s32.totalorder %s79, %s93
      %p95 = scmp.eq.s32.totalorder %s27, 0
      %p96 = por %p94, %p95
      %s98 = sadd.s32 %s97, 1
      %p101 = scmp.eq.s32.totalorder %s21, 1
      %p102 = scmp.ne.s32.totalorder %s97, %s99
      %p103 = scmp.eq.s32.totalorder %s21, 0
      %p104 = por %p102, %p103
      %p105 = scmp.ne.s32.totalorder %s97, %s99
      %p106 = scmp.eq.s32.totalorder %s26, 1
      %p107 = por %p105, %p106
      %p108 = scmp.ne.s32.totalorder %s99, %s100
      %p109 = scmp.eq.s32.totalorder %s26, 0
      %p110 = por %p108, %p109
      %p111 = scmp.ne.s32.totalorder %s99, %s100
      %p112 = scmp.eq.s32.totalorder %s27, 1
      %p113 = por %p111, %p112
      %p115 = scmp.ne.s32.totalorder %s100, %s114
      %p116 = scmp.eq.s32.totalorder %s27, 0
      %p117 = por %p115, %p116
      %s119 = sadd.s32 %s118, 1
      %p122 = scmp.eq.s32.totalorder %s21, 1
      %p123 = scmp.ne.s32.totalorder %s118, %s120
      %p124 = scmp.eq.s32.totalorder %s21, 0
      %p125 = por %p123, %p124
      %p126 = scmp.ne.s32.totalorder %s118, %s120
      %p127 = scmp.eq.s32.totalorder %s26, 1
      %p128 = por %p126, %p127
      %p129 = scmp.ne.s32.totalorder %s120, %s121
      %p130 = scmp.eq.s32.totalorder %s26, 0
      %p131 = por %p129, %p130
      %p132 = scmp.ne.s32.totalorder %s120, %s121
      %p133 = scmp.eq.s32.totalorder %s27, 1
      %p134 = por %p132, %p133
      %p136 = scmp.ne.s32.totalorder %s121, %s135
      %p137 = scmp.eq.s32.totalorder %s27, 0
      %p138 = por %p136, %p137
      %s140 = sadd.s32 %s139, 1
      %p143 = scmp.eq.s32.totalorder %s21, 1
      %p144 = scmp.ne.s32.totalorder %s139, %s141
      %p145 = scmp.eq.s32.totalorder %s21, 0
      %p146 = por %p144, %p145
      %p147 = scmp.ne.s32.totalorder %s139, %s141
      %p148 = scmp.eq.s32.totalorder %s26, 1
      %p149 = por %p147, %p148
      %p150 = scmp.ne.s32.totalorder %s141, %s142
      %p151 = scmp.eq.s32.totalorder %s26, 0
      %p152 = por %p150, %p151
      %p153 = scmp.ne.s32.totalorder %s141, %s142
      %p154 = scmp.eq.s32.totalorder %s27, 1
      %p155 = por %p153, %p154
      %p157 = scmp.ne.s32.totalorder %s142, %s156
      %p158 = scmp.eq.s32.totalorder %s27, 0
      %p159 = por %p157, %p158
      %s161 = sadd.s32 %s160, 1
      %p164 = scmp.eq.s32.totalorder %s21, 1
      %p165 = scmp.ne.s32.totalorder %s160, %s162
      %p166 = scmp.eq.s32.totalorder %s21, 0
      %p167 = por %p165, %p166
      %p168 = scmp.ne.s32.totalorder %s160, %s162
      %p169 = scmp.eq.s32.totalorder %s26, 1
      %p170 = por %p168, %p169
      %p171 = scmp.ne.s32.totalorder %s162, %s163
      %p172 = scmp.eq.s32.totalorder %s26, 0
      %p173 = por %p171, %p172
      %p174 = scmp.ne.s32.totalorder %s162, %s163
      %p175 = scmp.eq.s32.totalorder %s27, 1
      %p176 = por %p174, %p175
      %p178 = scmp.ne.s32.totalorder %s163, %s177
      %p179 = scmp.eq.s32.totalorder %s27, 0
      %p180 = por %p178, %p179
      %s182 = sadd.s32 %s181, 1
      %p185 = scmp.eq.s32.totalorder %s21, 1
      %p186 = scmp.ne.s32.totalorder %s181, %s183
      %p187 = scmp.eq.s32.totalorder %s21, 0
      %p188 = por %p186, %p187
      %p189 = scmp.ne.s32.totalorder %s181, %s183
      %p190 = scmp.eq.s32.totalorder %s26, 1
      %p191 = por %p189, %p190
      %p192 = scmp.ne.s32.totalorder %s183, %s184
      %p193 = scmp.eq.s32.totalorder %s26, 0
      %p194 = por %p192, %p193
      %p195 = scmp.ne.s32.totalorder %s183, %s184
      %p196 = scmp.eq.s32.totalorder %s27, 1
      %p197 = por %p195, %p196
      %p199 = scmp.ne.s32.totalorder %s184, %s198
      %p200 = scmp.eq.s32.totalorder %s27, 0
      %p201 = por %p199, %p200
      %s203 = sadd.s32 %s202, 1
      %p206 = scmp.eq.s32.totalorder %s21, 1
      %p207 = scmp.ne.s32.totalorder %s202, %s204
      %p208 = scmp.eq.s32.totalorder %s21, 0
      %p209 = por %p207, %p208
      %p210 = scmp.ne.s32.totalorder %s202, %s204
      %p211 = scmp.eq.s32.totalorder %s26, 1
      %p212 = por %p210, %p211
      %p213 = scmp.ne.s32.totalorder %s204, %s205
      %p214 = scmp.eq.s32.totalorder %s26, 0
      %p215 = por %p213, %p214
      %p216 = scmp.ne.s32.totalorder %s204, %s205
      %p217 = scmp.eq.s32.totalorder %s27, 1
      %p218 = por %p216, %p217
      %p220 = scmp.ne.s32.totalorder %s205, %s219
      %p221 = scmp.eq.s32.totalorder %s27, 0
      %p222 = por %p220, %p221
      %s224 = sadd.s32 %s223, 1
      %p227 = scmp.eq.s32.totalorder %s21, 1
      %p228 = scmp.ne.s32.totalorder %s223, %s225
      %p229 = scmp.eq.s32.totalorder %s21, 0
      %p230 = por %p228, %p229
      %p231 = scmp.ne.s32.totalorder %s223, %s225
      %p232 = scmp.eq.s32.totalorder %s26, 1
      %p233 = por %p231, %p232
      %p234 = scmp.ne.s32.totalorder %s225, %s226
      %p235 = scmp.eq.s32.totalorder %s26, 0
      %p236 = por %p234, %p235
      %p237 = scmp.ne.s32.totalorder %s225, %s226
      %p238 = scmp.eq.s32.totalorder %s27, 1
      %p239 = por %p237, %p238
      %p241 = scmp.ne.s32.totalorder %s226, %s240
      %p242 = scmp.eq.s32.totalorder %s27, 0
      %p243 = por %p241, %p242
      %s245 = sadd.s32 %s244, 1
      %p248 = scmp.eq.s32.totalorder %s21, 1
      %p249 = scmp.ne.s32.totalorder %s244, %s246
      %p250 = scmp.eq.s32.totalorder %s21, 0
      %p251 = por %p249, %p250
      %p252 = scmp.ne.s32.totalorder %s244, %s246
      %p253 = scmp.eq.s32.totalorder %s26, 1
      %p254 = por %p252, %p253
      %p255 = scmp.ne.s32.totalorder %s246, %s247
      %p256 = scmp.eq.s32.totalorder %s26, 0
      %p257 = por %p255, %p256
      %p258 = scmp.ne.s32.totalorder %s246, %s247
      %p259 = scmp.eq.s32.totalorder %s27, 1
      %p260 = por %p258, %p259
      %p262 = scmp.ne.s32.totalorder %s247, %s261
      %p263 = scmp.eq.s32.totalorder %s27, 0
      %p264 = por %p262, %p263
      %s266 = sadd.s32 %s265, 1
      %p269 = scmp.eq.s32.totalorder %s21, 1
      %p270 = scmp.ne.s32.totalorder %s265, %s267
      %p271 = scmp.eq.s32.totalorder %s21, 0
      %p272 = por %p270, %p271
      %p273 = scmp.ne.s32.totalorder %s265, %s267
      %p274 = scmp.eq.s32.totalorder %s26, 1
      %p275 = por %p273, %p274
      %p276 = scmp.ne.s32.totalorder %s267, %s268
      %p277 = scmp.eq.s32.totalorder %s26, 0
      %p278 = por %p276, %p277
      %p279 = scmp.ne.s32.totalorder %s267, %s268
      %p280 = scmp.eq.s32.totalorder %s27, 1
      %p281 = por %p279, %p280
      %p283 = scmp.ne.s32.totalorder %s268, %s282
      %p284 = scmp.eq.s32.totalorder %s27, 0
      %p285 = por %p283, %p284
      %s287 = sadd.s32 %s286, 1
      %p290 = scmp.eq.s32.totalorder %s21, 1
      %p291 = scmp.ne.s32.totalorder %s286, %s288
      %p292 = scmp.eq.s32.totalorder %s21, 0
      %p293 = por %p291, %p292
      %p294 = scmp.ne.s32.totalorder %s286, %s288
      %p295 = scmp.eq.s32.totalorder %s26, 1
      %p296 = por %p294, %p295
      %p297 = scmp.ne.s32.totalorder %s288, %s289
      %p298 = scmp.eq.s32.totalorder %s26, 0
      %p299 = por %p297, %p298
      %p300 = scmp.ne.s32.totalorder %s288, %s289
      %p301 = scmp.eq.s32.totalorder %s27, 1
      %p302 = por %p300, %p301
      %p304 = scmp.ne.s32.totalorder %s289, %s303
      %p305 = scmp.eq.s32.totalorder %s27, 0
      %p306 = por %p304, %p305
      %s308 = sadd.s32 %s307, 1
      %p311 = scmp.eq.s32.totalorder %s21, 1
      %p312 = scmp.ne.s32.totalorder %s307, %s309
      %p313 = scmp.eq.s32.totalorder %s21, 0
      %p314 = por %p312, %p313
      %p315 = scmp.ne.s32.totalorder %s307, %s309
      %p316 = scmp.eq.s32.totalorder %s26, 1
      %p317 = por %p315, %p316
      %p318 = scmp.ne.s32.totalorder %s309, %s310
      %p319 = scmp.eq.s32.totalorder %s26, 0
      %p320 = por %p318, %p319
      %p321 = scmp.ne.s32.totalorder %s309, %s310
      %p322 = scmp.eq.s32.totalorder %s27, 1
      %p323 = por %p321, %p322
      %p325 = scmp.ne.s32.totalorder %s310, %s324
      %p326 = scmp.eq.s32.totalorder %s27, 0
      %p327 = por %p325, %p326
      %s329 = sadd.s32 %s328, 1
      %p332 = scmp.eq.s32.totalorder %s21, 1
      %p333 = scmp.ne.s32.totalorder %s328, %s330
      %p334 = scmp.eq.s32.totalorder %s21, 0
      %p335 = por %p333, %p334
      %p336 = scmp.ne.s32.totalorder %s328, %s330
      %p337 = scmp.eq.s32.totalorder %s26, 1
      %p338 = por %p336, %p337
      %p339 = scmp.ne.s32.totalorder %s330, %s331
      %p340 = scmp.eq.s32.totalorder %s26, 0
      %p341 = por %p339, %p340
      %p342 = scmp.ne.s32.totalorder %s330, %s331
      %p343 = scmp.eq.s32.totalorder %s27, 1
      %p344 = por %p342, %p343
      %p346 = scmp.ne.s32.totalorder %s331, %s345
      %p347 = scmp.eq.s32.totalorder %s27, 0
      %p348 = por %p346, %p347
      %s349 = ssub.s32 %s21, %s28
      %p350 = scmp.eq.s32.totalorder %s349, 0
      %s352 = sadd.s32 %s351, 1
      %s353 = scalar_select %p350, %s351, %s352
      %p356 = pneg %p350
      %p357 = scmp.eq.s32.totalorder %s21, 1
      %p358 = por %p356, %p357
      %p359 = scmp.ne.s32.totalorder %s351, %s354
      %p360 = scmp.eq.s32.totalorder %s21, 0
      %p361 = por %p359, %p360
      %p362 = scmp.ne.s32.totalorder %s351, %s354
      %p363 = scmp.eq.s32.totalorder %s26, 1
      %p364 = por %p362, %p363
      %p365 = scmp.ne.s32.totalorder %s354, %s355
      %p366 = scmp.eq.s32.totalorder %s26, 0
      %p367 = por %p365, %p366
      %p368 = scmp.ne.s32.totalorder %s354, %s355
      %p369 = scmp.eq.s32.totalorder %s27, 1
      %p370 = por %p368, %p369
      %p372 = scmp.ne.s32.totalorder %s355, %s371
      %p373 = scmp.eq.s32.totalorder %s27, 0
      %p374 = por %p372, %p373
      %p375 = scmp.le.s32.totalorder 1, %s21
      %p376 = scmp.lt.s32.totalorder %s21, 3
      %p377 = pnand %p375, %p376
      %p378 = pneg %p377
      // Predicated region
      $region9: #{_lambda_.1} parent=5 // pred_check
        _
      $region10: #{_lambda_.1} parent=5 // pred_check_branch
        %380 = sbr.rel (%p377) target = $region12
      $region11: #{_lambda_.1} parent=5 // pred_region
        %s381 = ssub.s32 %s21, 1
        // Predicated region
        $region13: #{_lambda_.1} parent=11 // pred_check
          %p382 = pneg %p68
        $region14: #{_lambda_.1} parent=11 // pred_check_branch
          %384 = sbr.rel (%p382) target = $region16
        $region15: #{_lambda_.1} parent=11 // pred_region
          _
        $region16: #{_lambda_.1} parent=11 // pred_fallthru
          _
        // Predicated region
        $region17: #{_lambda_.1} parent=11 // pred_check
          %p385 = pneg %p89
        $region18: #{_lambda_.1} parent=11 // pred_check_branch
          %387 = sbr.rel (%p385) target = $region20
        $region19: #{_lambda_.1} parent=11 // pred_region
          _
        $region20: #{_lambda_.1} parent=11 // pred_fallthru
          _
        // Predicated region
        $region21: #{_lambda_.1} parent=11 // pred_check
          %p388 = pneg %p110
        $region22: #{_lambda_.1} parent=11 // pred_check_branch
          %390 = sbr.rel (%p388) target = $region24
        $region23: #{_lambda_.1} parent=11 // pred_region
          _
        $region24: #{_lambda_.1} parent=11 // pred_fallthru
          _
        // Predicated region
        $region25: #{_lambda_.1} parent=11 // pred_check
          %p391 = pneg %p131
        $region26: #{_lambda_.1} parent=11 // pred_check_branch
          %393 = sbr.rel (%p391) target = $region28
        $region27: #{_lambda_.1} parent=11 // pred_region
          _
        $region28: #{_lambda_.1} parent=11 // pred_fallthru
          _
        // Predicated region
        $region29: #{_lambda_.1} parent=11 // pred_check
          %p394 = pneg %p152
        $region30: #{_lambda_.1} parent=11 // pred_check_branch
          %396 = sbr.rel (%p394) target = $region32
        $region31: #{_lambda_.1} parent=11 // pred_region
          _
        $region32: #{_lambda_.1} parent=11 // pred_fallthru
          _
        // Predicated region
        $region33: #{_lambda_.1} parent=11 // pred_check
          %p397 = pneg %p173
        $region34: #{_lambda_.1} parent=11 // pred_check_branch
          %399 = sbr.rel (%p397) target = $region36
        $region35: #{_lambda_.1} parent=11 // pred_region
          _
        $region36: #{_lambda_.1} parent=11 // pred_fallthru
          _
        // Predicated region
        $region37: #{_lambda_.1} parent=11 // pred_check
          %p400 = pneg %p194
        $region38: #{_lambda_.1} parent=11 // pred_check_branch
          %402 = sbr.rel (%p400) target = $region40
        $region39: #{_lambda_.1} parent=11 // pred_region
          _
        $region40: #{_lambda_.1} parent=11 // pred_fallthru
          _
        // Predicated region
        $region41: #{_lambda_.1} parent=11 // pred_check
          %p403 = pneg %p215
        $region42: #{_lambda_.1} parent=11 // pred_check_branch
          %405 = sbr.rel (%p403) target = $region44
        $region43: #{_lambda_.1} parent=11 // pred_region
          _
        $region44: #{_lambda_.1} parent=11 // pred_fallthru
          _
        // Predicated region
        $region45: #{_lambda_.1} parent=11 // pred_check
          %p406 = pneg %p236
        $region46: #{_lambda_.1} parent=11 // pred_check_branch
          %408 = sbr.rel (%p406) target = $region48
        $region47: #{_lambda_.1} parent=11 // pred_region
          _
        $region48: #{_lambda_.1} parent=11 // pred_fallthru
          _
        // Predicated region
        $region49: #{_lambda_.1} parent=11 // pred_check
          %p409 = pneg %p257
        $region50: #{_lambda_.1} parent=11 // pred_check_branch
          %411 = sbr.rel (%p409) target = $region52
        $region51: #{_lambda_.1} parent=11 // pred_region
          _
        $region52: #{_lambda_.1} parent=11 // pred_fallthru
          _
        // Predicated region
        $region53: #{_lambda_.1} parent=11 // pred_check
          %p412 = pneg %p278
        $region54: #{_lambda_.1} parent=11 // pred_check_branch
          %414 = sbr.rel (%p412) target = $region56
        $region55: #{_lambda_.1} parent=11 // pred_region
          _
        $region56: #{_lambda_.1} parent=11 // pred_fallthru
          _
        // Predicated region
        $region57: #{_lambda_.1} parent=11 // pred_check
          %p415 = pneg %p299
        $region58: #{_lambda_.1} parent=11 // pred_check_branch
          %417 = sbr.rel (%p415) target = $region60
        $region59: #{_lambda_.1} parent=11 // pred_region
          _
        $region60: #{_lambda_.1} parent=11 // pred_fallthru
          _
        // Predicated region
        $region61: #{_lambda_.1} parent=11 // pred_check
          %p418 = pneg %p320
        $region62: #{_lambda_.1} parent=11 // pred_check_branch
          %420 = sbr.rel (%p418) target = $region64
        $region63: #{_lambda_.1} parent=11 // pred_region
          _
        $region64: #{_lambda_.1} parent=11 // pred_fallthru
          _
        // Predicated region
        $region65: #{_lambda_.1} parent=11 // pred_check
          %p421 = pneg %p341
        $region66: #{_lambda_.1} parent=11 // pred_check_branch
          %423 = sbr.rel (%p421) target = $region68
        $region67: #{_lambda_.1} parent=11 // pred_region
          _
        $region68: #{_lambda_.1} parent=11 // pred_fallthru
          _
      $region12: #{_lambda_.1} parent=5 // pred_fallthru
        _
      %p424 = scmp.lt.s32.totalorder %s21, 2
      // Predicated region
      $region69: #{_lambda_.1} parent=5 // pred_check
        %p425 = pneg %p424
      $region70: #{_lambda_.1} parent=5 // pred_check_branch
        %427 = sbr.rel (%p425) target = $region72
      $region71: #{_lambda_.1} parent=5 // pred_region
        // Predicated region
        $region73: #{_lambda_.1} parent=71 // pred_check
          %p428 = pneg %p41
        $region74: #{_lambda_.1} parent=71 // pred_check_branch
          %430 = sbr.rel (%p428) target = $region76
        $region75: #{_lambda_.1} parent=71 // pred_region
          %s431 = smul.u32 32, %s21
          %s432 = ssub.s32 38, %s431
          %p433 = scmp.lt.s32.totalorder %s432, 32
          %s434 = scalar_select %p433, %s432, 32
          %s435 = smul.u32 8, %s434
          %p436 = scmp.lt.s32.totalorder %s431, 37
          %s437 = scalar_select %p436, %s431, 37
          %s438 = smul.addr %s437, 8
          %s439 = scalar_lea.vmem %s0, %s438
          %s440 = smul.u32 32, %s21
          %s441 = ssub.s32 38, %s440
          %p442 = scmp.lt.s32.totalorder %s441, 32
          %s443 = scalar_select %p442, %s441, 32
          %s444 = smul.u32 8, %s443
        $region76: #{_lambda_.1} parent=71 // pred_fallthru
          _
      $region72: #{_lambda_.1} parent=5 // pred_fallthru
        _
      %p445 = scmp.le.s32.totalorder 1, %s21
      %p446 = scmp.lt.s32.totalorder %s21, 3
      %p447 = pnand %p445, %p446
      %p448 = pneg %p447
      // Predicated region
      $region77: #{_lambda_.1} parent=5 // pred_check
        _
      $region78: #{_lambda_.1} parent=5 // pred_check_branch
        %450 = sbr.rel (%p447) target = $region80
      $region79: #{_lambda_.1} parent=5 // pred_region
        %s451 = ssub.s32 %s21, 1
        %s452 = smul.u32 32, %s26
        %s453 = ssub.s32 38, %s452
        %p454 = scmp.lt.s32.totalorder %s453, 32
        %s455 = scalar_select %p454, %s453, 32
        %s456 = smul.u32 8, %s455
        %p457 = scmp.lt.s32.totalorder %s452, 37
        %s458 = scalar_select %p457, %s452, 37
        %s459 = smul.addr %s458, 8
        %s460 = scalar_lea.vmem %s0, %s459
        %p461 = pneg %p47
        %p462 = pneg %p44
        %p463 = pneg %p68
        %p464 = pneg %p65
        %p465 = pneg %p89
        %p466 = pneg %p86
        %p467 = pneg %p110
        %p468 = pneg %p107
        %p469 = pneg %p131
        %p470 = pneg %p128
        %p471 = pneg %p152
        %p472 = pneg %p149
        %p473 = pneg %p173
        %p474 = pneg %p170
        %p475 = pneg %p194
        %p476 = pneg %p191
        %p477 = pneg %p215
        %p478 = pneg %p212
        %p479 = pneg %p236
        %p480 = pneg %p233
        %p481 = pneg %p257
        %p482 = pneg %p254
        %p483 = pneg %p278
        %p484 = pneg %p275
        %p485 = pneg %p299
        %p486 = pneg %p296
        %p487 = pneg %p320
        %p488 = pneg %p317
        %p489 = pneg %p341
        %p490 = pneg %p338
        %p491 = pneg %p367
        %p492 = pneg %p364
        %s493 = sand.u32 %s354, 1
        %s494 = sand.u32 %s354, 1
        %s495 = smul.addr %s494, 32
        %s496 = scalar_lea.vmem [#allocation2], %s495
        %s497 = smul.u32 32, %s26
        %s498 = ssub.s32 38, %s497
        %p499 = scmp.lt.s32.totalorder %s498, 32
        %s500 = scalar_select %p499, %s498, 32
        %s501 = smul.u32 8, %s500
        %p502 = scmp.lt.s32.totalorder %s497, 37
        %s503 = scalar_select %p502, %s497, 37
        %s504 = smul.addr %s503, 8
        %s505 = scalar_lea.vmem %s0, %s504
        %s506 = smul.u32 32, %s26
        %s507 = ssub.s32 38, %s506
        %p508 = scmp.lt.s32.totalorder %s507, 32
        %s509 = scalar_select %p508, %s507, 32
        %s510 = smul.u32 8, %s509
        %s511 = smul.u32 2, %s26
        %s512 = ssub.s32 3, %s511
        %p513 = scmp.lt.s32.totalorder %s512, 2
        %s514 = scalar_select %p513, %s512, 2
        %s515 = smul.u32 16, %s514
        %v516 = vld [vmem:[%s1] sm:$0xff]
        %v517 = vld [vmem:[%s2] sm:$0xff]
        %v518 = vld [vmem:[%s2 + $0x8] sm:$0xff]
        %v519 = vld [vmem:[%s3] sm:$0x1]
        %v521 = vperm.slane %v519, 0
        %vm523 = vcmask 130048
        %v525 = vsel %vm523, %v516, 0
        %527 = vmatpush.msra.mxu0 0.0
        %528 = vmatpush.msra.mxu0 0.0
        %529 = vmatpush.msra.mxu0 0.0
        %530 = vmatpush.msra.mxu0 0.0
        %531 = vmatpush.msra.mxu0 0.0
        %532 = vmatpush.msra.mxu0 0.0
        %533 = vmatpush.msra.mxu0 0.0
        %534 = vmatpush.msra.mxu0 0.0
        %535 = vmatpush.msra.mxu0 0.0
        %536 = vmatpush.msra.mxu0 0.0
        %537 = vmatpush.msra.mxu0 0.0
        %538 = vmatpush.msra.mxu0 0.0
        %539 = vmatpush.msra.mxu0 0.0
        %540 = vmatpush.msra.mxu0 0.0
        %541 = vmatpush.msra.mxu0 %v518
        %542 = vmatpush.msra.mxu0 %v517
        %543 = vmatmul.f32.gmra.mxu0 %v525
        %v544 = vpop.f32.mrf.mxu0
        %v545 = vadd.f32 %v521, %v544
        %546 = vdwg.mxu0
        %v547 = vtanh.pop %v545
        %v548 = vld [vmem:[%s4] sm:$0xff]
        %v549 = vld [vmem:[%s4 + $0x8] sm:$0xff]
        %v550 = vld [vmem:[%s4 + $0x10] sm:$0xff]
        %v551 = vld [vmem:[%s4 + $0x18] sm:$0xff]
        %v552 = vld [vmem:[%s5] sm:$0x1]
        %v554 = vperm.slane %v552, 0
        %vm556 = vcmask 261120
        %v558 = vsel %vm556, %v547, 0
        %560 = vmatpush.msra.mxu0 0.0
        %561 = vmatpush.msra.mxu0 0.0
        %562 = vmatpush.msra.mxu0 0.0
        %563 = vmatpush.msra.mxu0 0.0
        %564 = vmatpush.msra.mxu0 0.0
        %565 = vmatpush.msra.mxu0 0.0
        %566 = vmatpush.msra.mxu0 0.0
        %567 = vmatpush.msra.mxu0 0.0
        %568 = vmatpush.msra.mxu0 0.0
        %569 = vmatpush.msra.mxu0 0.0
        %570 = vmatpush.msra.mxu0 0.0
        %571 = vmatpush.msra.mxu0 0.0
        %572 = vmatpush.msra.mxu0 %v551
        %573 = vmatpush.msra.mxu0 %v550
        %574 = vmatpush.msra.mxu0 %v549
        %575 = vmatpush.msra.mxu0 %v548
        %576 = vmatmul.f32.gmra.mxu0 %v558
        %v577 = vpop.f32.mrf.mxu0
        %v578 = vadd.f32 %v554, %v577
        %579 = vdwg.mxu0
        %v580 = vtanh.pop %v578
        %v581 = vld [vmem:[%s6] sm:$0xff]
        %v582 = vld [vmem:[%s6 + $0x8] sm:$0xff]
        %v583 = vld [vmem:[%s6 + $0x10] sm:$0xff]
        %v584 = vld [vmem:[%s6 + $0x18] sm:$0xff]
        %v585 = vld [vmem:[%s6 + $0x20] sm:$0xff]
        %v586 = vld [vmem:[%s6 + $0x28] sm:$0xff]
        %v587 = vld [vmem:[%s6 + $0x30] sm:$0xff]
        %v588 = vld [vmem:[%s6 + $0x38] sm:$0xff]
        %v589 = vld [vmem:[%s7] sm:$0x3]
        %v591 = vperm.slane %v589, 0
        %v592 = vperm.slane %v589, 1
        %v596 = vsel %vm556, %v580, 0
        %598 = vmatpush.msra.mxu0 0.0
        %599 = vmatpush.msra.mxu0 0.0
        %600 = vmatpush.msra.mxu0 0.0
        %601 = vmatpush.msra.mxu0 0.0
        %602 = vmatpush.msra.mxu0 0.0
        %603 = vmatpush.msra.mxu0 0.0
        %604 = vmatpush.msra.mxu0 0.0
        %605 = vmatpush.msra.mxu0 0.0
        %606 = vmatpush.msra.mxu0 0.0
        %607 = vmatpush.msra.mxu0 0.0
        %608 = vmatpush.msra.mxu0 0.0
        %609 = vmatpush.msra.mxu0 0.0
        %610 = vmatpush.msra.mxu0 %v587
        %611 = vmatpush.msra.mxu0 %v585
        %612 = vmatpush.msra.mxu0 %v583
        %613 = vmatpush.msra.mxu0 %v581
        %614 = vmatmul.f32.gmra.mxu0 %v596
        %v615 = vpop.f32.mrf.mxu0
        %v616 = vadd.f32 %v591, %v615
        %617 = vdwg.mxu0
        %618 = vmatpush.msra.mxu0 0.0
        %619 = vmatpush.msra.mxu0 0.0
        %620 = vmatpush.msra.mxu0 0.0
        %621 = vmatpush.msra.mxu0 0.0
        %622 = vmatpush.msra.mxu0 0.0
        %623 = vmatpush.msra.mxu0 0.0
        %624 = vmatpush.msra.mxu0 0.0
        %625 = vmatpush.msra.mxu0 0.0
        %626 = vmatpush.msra.mxu0 0.0
        %627 = vmatpush.msra.mxu0 0.0
        %628 = vmatpush.msra.mxu0 0.0
        %629 = vmatpush.msra.mxu0 0.0
        %630 = vmatpush.msra.mxu0 %v588
        %631 = vmatpush.msra.mxu0 %v586
        %632 = vmatpush.msra.mxu0 %v584
        %633 = vmatpush.msra.mxu0 %v582
        %634 = vmatmul.f32.gmra.mxu0 %v596
        %v635 = vpop.f32.mrf.mxu0
        %v636 = vadd.f32 %v592, %v635
        %637 = vdwg.mxu0
        %v638 = vld [vmem:[%s505] sm:$0xff]
        %v639 = vld [vmem:[%s505 + $0x8] sm:$0xff]
        %v640 = vld [vmem:[%s505 + $0x10] sm:$0xff]
        %v641 = vld [vmem:[%s505 + $0x18] sm:$0xff]
        %v642 = vld [vmem:[%s505 + $0x20] sm:$0xff]
        %v643 = vld [vmem:[%s505 + $0x28] sm:$0xff]
        %v644 = vld [vmem:[%s505 + $0x30] sm:$0xff]
        %v645 = vld [vmem:[%s505 + $0x38] sm:$0xff]
        %v646 = vld [vmem:[%s505 + $0x40] sm:$0xff]
        %v647 = vld [vmem:[%s505 + $0x48] sm:$0xff]
        %v648 = vld [vmem:[%s505 + $0x50] sm:$0xff]
        %v649 = vld [vmem:[%s505 + $0x58] sm:$0xff]
        %v650 = vld [vmem:[%s505 + $0x60] sm:$0xff]
        %v651 = vld [vmem:[%s505 + $0x68] sm:$0xff]
        %v652 = vld [vmem:[%s505 + $0x70] sm:$0xff]
        %v653 = vld [vmem:[%s505 + $0x78] sm:$0xff]
        %v654 = vld [vmem:[%s505 + $0x80] sm:$0xff]
        %v655 = vld [vmem:[%s505 + $0x88] sm:$0xff]
        %v656 = vld [vmem:[%s505 + $0x90] sm:$0xff]
        %v657 = vld [vmem:[%s505 + $0x98] sm:$0xff]
        %v658 = vld [vmem:[%s505 + $0xa0] sm:$0xff]
        %v659 = vld [vmem:[%s505 + $0xa8] sm:$0xff]
        %v660 = vld [vmem:[%s505 + $0xb0] sm:$0xff]
        %v661 = vld [vmem:[%s505 + $0xb8] sm:$0xff]
        %v662 = vld [vmem:[%s505 + $0xc0] sm:$0xff]
        %v663 = vld [vmem:[%s505 + $0xc8] sm:$0xff]
        %v664 = vld [vmem:[%s505 + $0xd0] sm:$0xff]
        %v665 = vld [vmem:[%s505 + $0xd8] sm:$0xff]
        %v666 = vld [vmem:[%s505 + $0xe0] sm:$0xff]
        %v667 = vld [vmem:[%s505 + $0xe8] sm:$0xff]
        %v668 = vld [vmem:[%s505 + $0xf0] sm:$0xff]
        %v669 = vld [vmem:[%s505 + $0xf8] sm:$0xff]
        %v670 = vld [vmem:[%s8] sm:$0x3]
        %v671 = vld [vmem:[%s9] sm:$0x1]
        %v673 = vperm.slane %v671, 0
        %vm675 = vcmask 15360
        %v677 = vsel %vm675, %v638, 0
        %v680 = vsel %vm675, %v639, 0
        %v683 = vsel %vm675, %v640, 0
        %v686 = vsel %vm675, %v641, 0
        %v689 = vsel %vm675, %v642, 0
        %v692 = vsel %vm675, %v643, 0
        %v695 = vsel %vm675, %v644, 0
        %v698 = vsel %vm675, %v645, 0
        %v701 = vsel %vm675, %v646, 0
        %v704 = vsel %vm675, %v647, 0
        %v707 = vsel %vm675, %v648, 0
        %v710 = vsel %vm675, %v649, 0
        %v713 = vsel %vm675, %v650, 0
        %v716 = vsel %vm675, %v651, 0
        %v719 = vsel %vm675, %v652, 0
        %v722 = vsel %vm675, %v653, 0
        %v725 = vsel %vm675, %v654, 0
        %v728 = vsel %vm675, %v655, 0
        %v731 = vsel %vm675, %v656, 0
        %v734 = vsel %vm675, %v657, 0
        %v737 = vsel %vm675, %v658, 0
        %v740 = vsel %vm675, %v659, 0
        %v743 = vsel %vm675, %v660, 0
        %v746 = vsel %vm675, %v661, 0
        %v749 = vsel %vm675, %v662, 0
        %v752 = vsel %vm675, %v663, 0
        %v755 = vsel %vm675, %v664, 0
        %v758 = vsel %vm675, %v665, 0
        %v761 = vsel %vm675, %v666, 0
        %v764 = vsel %vm675, %v667, 0
        %v767 = vsel %vm675, %v668, 0
        %v770 = vsel %vm675, %v669, 0
        %vm772 = vcmask 1041408
        %v774 = vsel %vm772, %v670, 0
        %776 = vmatpush.msra.mxu0 0.0
        %777 = vmatpush.msra.mxu0 0.0
        %778 = vmatpush.msra.mxu0 0.0
        %779 = vmatpush.msra.mxu0 0.0
        %780 = vmatpush.msra.mxu0 0.0
        %781 = vmatpush.msra.mxu0 0.0
        %782 = vmatpush.msra.mxu0 0.0
        %783 = vmatpush.msra.mxu0 0.0
        %784 = vmatpush.msra.mxu0 0.0
        %785 = vmatpush.msra.mxu0 0.0
        %786 = vmatpush.msra.mxu0 0.0
        %787 = vmatpush.msra.mxu0 0.0
        %788 = vmatpush.msra.mxu0 0.0
        %789 = vmatpush.msra.mxu0 0.0
        %790 = vmatpush.msra.mxu0 0.0
        %791 = vmatpush.msra.mxu0 %v774
        %792 = vmatmul.f32.gmra.mxu0 %v677
        %v793 = vpop.f32.mrf.mxu0
        %v794 = vadd.f32 %v673, %v793
        %795 = vmatmul.f32.gmra.mxu0 %v680
        %v796 = vpop.f32.mrf.mxu0
        %v797 = vadd.f32 %v673, %v796
        %798 = vmatmul.f32.gmra.mxu0 %v683
        %v799 = vpop.f32.mrf.mxu0
        %v800 = vadd.f32 %v673, %v799
        %801 = vmatmul.f32.gmra.mxu0 %v686
        %v802 = vpop.f32.mrf.mxu0
        %v803 = vadd.f32 %v673, %v802
        %804 = vmatmul.f32.gmra.mxu0 %v689
        %v805 = vpop.f32.mrf.mxu0
        %v806 = vadd.f32 %v673, %v805
        %807 = vmatmul.f32.gmra.mxu0 %v692
        %v808 = vpop.f32.mrf.mxu0
        %v809 = vadd.f32 %v673, %v808
        %810 = vmatmul.f32.gmra.mxu0 %v695
        %v811 = vpop.f32.mrf.mxu0
        %v812 = vadd.f32 %v673, %v811
        %813 = vmatmul.f32.gmra.mxu0 %v698
        %v814 = vpop.f32.mrf.mxu0
        %v815 = vadd.f32 %v673, %v814
        %816 = vmatmul.f32.gmra.mxu0 %v701
        %v817 = vpop.f32.mrf.mxu0
        %v818 = vadd.f32 %v673, %v817
        %819 = vmatmul.f32.gmra.mxu0 %v704
        %v820 = vpop.f32.mrf.mxu0
        %v821 = vadd.f32 %v673, %v820
        %822 = vmatmul.f32.gmra.mxu0 %v707
        %v823 = vpop.f32.mrf.mxu0
        %v824 = vadd.f32 %v673, %v823
        %825 = vmatmul.f32.gmra.mxu0 %v710
        %v826 = vpop.f32.mrf.mxu0
        %v827 = vadd.f32 %v673, %v826
        %828 = vmatmul.f32.gmra.mxu0 %v713
        %v829 = vpop.f32.mrf.mxu0
        %v830 = vadd.f32 %v673, %v829
        %831 = vmatmul.f32.gmra.mxu0 %v716
        %v832 = vpop.f32.mrf.mxu0
        %v833 = vadd.f32 %v673, %v832
        %834 = vmatmul.f32.gmra.mxu0 %v719
        %v835 = vpop.f32.mrf.mxu0
        %v836 = vadd.f32 %v673, %v835
        %837 = vmatmul.f32.gmra.mxu0 %v722
        %v838 = vpop.f32.mrf.mxu0
        %v839 = vadd.f32 %v673, %v838
        %840 = vmatmul.f32.gmra.mxu0 %v725
        %v841 = vpop.f32.mrf.mxu0
        %v842 = vadd.f32 %v673, %v841
        %843 = vmatmul.f32.gmra.mxu0 %v728
        %v844 = vpop.f32.mrf.mxu0
        %v845 = vadd.f32 %v673, %v844
        %846 = vmatmul.f32.gmra.mxu0 %v731
        %v847 = vpop.f32.mrf.mxu0
        %v848 = vadd.f32 %v673, %v847
        %849 = vmatmul.f32.gmra.mxu0 %v734
        %v850 = vpop.f32.mrf.mxu0
        %v851 = vadd.f32 %v673, %v850
        %852 = vmatmul.f32.gmra.mxu0 %v737
        %v853 = vpop.f32.mrf.mxu0
        %v854 = vadd.f32 %v673, %v853
        %855 = vmatmul.f32.gmra.mxu0 %v740
        %v856 = vpop.f32.mrf.mxu0
        %v857 = vadd.f32 %v673, %v856
        %858 = vmatmul.f32.gmra.mxu0 %v743
        %v859 = vpop.f32.mrf.mxu0
        %v860 = vadd.f32 %v673, %v859
        %861 = vmatmul.f32.gmra.mxu0 %v746
        %v862 = vpop.f32.mrf.mxu0
        %v863 = vadd.f32 %v673, %v862
        %864 = vmatmul.f32.gmra.mxu0 %v749
        %v865 = vpop.f32.mrf.mxu0
        %v866 = vadd.f32 %v673, %v865
        %867 = vmatmul.f32.gmra.mxu0 %v752
        %v868 = vpop.f32.mrf.mxu0
        %v869 = vadd.f32 %v673, %v868
        %870 = vmatmul.f32.gmra.mxu0 %v755
        %v871 = vpop.f32.mrf.mxu0
        %v872 = vadd.f32 %v673, %v871
        %873 = vmatmul.f32.gmra.mxu0 %v758
        %v874 = vpop.f32.mrf.mxu0
        %v875 = vadd.f32 %v673, %v874
        %876 = vmatmul.f32.gmra.mxu0 %v761
        %v877 = vpop.f32.mrf.mxu0
        %v878 = vadd.f32 %v673, %v877
        %879 = vmatmul.f32.gmra.mxu0 %v764
        %v880 = vpop.f32.mrf.mxu0
        %v881 = vadd.f32 %v673, %v880
        %882 = vmatmul.f32.gmra.mxu0 %v767
        %v883 = vpop.f32.mrf.mxu0
        %v884 = vadd.f32 %v673, %v883
        %885 = vmatmul.f32.gmra.mxu0 %v770
        %v886 = vpop.f32.mrf.mxu0
        %v887 = vadd.f32 %v673, %v886
        %888 = vdwg.mxu0
        %v889 = vtanh.pop %v794
        %v890 = vtanh.pop %v797
        %v891 = vtanh.pop %v800
        %v892 = vtanh.pop %v803
        %v893 = vtanh.pop %v806
        %v894 = vtanh.pop %v809
        %v895 = vtanh.pop %v812
        %v896 = vtanh.pop %v815
        %v897 = vtanh.pop %v818
        %v898 = vtanh.pop %v821
        %v899 = vtanh.pop %v824
        %v900 = vtanh.pop %v827
        %v901 = vtanh.pop %v830
        %v902 = vtanh.pop %v833
        %v903 = vtanh.pop %v836
        %v904 = vtanh.pop %v839
        %v905 = vtanh.pop %v842
        %v906 = vtanh.pop %v845
        %v907 = vtanh.pop %v848
        %v908 = vtanh.pop %v851
        %v909 = vtanh.pop %v854
        %v910 = vtanh.pop %v857
        %v911 = vtanh.pop %v860
        %v912 = vtanh.pop %v863
        %v913 = vtanh.pop %v866
        %v914 = vtanh.pop %v869
        %v915 = vtanh.pop %v872
        %v916 = vtanh.pop %v875
        %v917 = vtanh.pop %v878
        %v918 = vtanh.pop %v881
        %v919 = vtanh.pop %v884
        %v920 = vtanh.pop %v887
        %v921 = vld [vmem:[%s10] sm:$0xff]
        %v922 = vld [vmem:[%s10 + $0x8] sm:$0xff]
        %v923 = vld [vmem:[%s10 + $0x10] sm:$0xff]
        %v924 = vld [vmem:[%s10 + $0x18] sm:$0xff]
        %v925 = vld [vmem:[%s11] sm:$0x1]
        %v927 = vperm.slane %v925, 0
        %v930 = vsel %vm556, %v889, 0
        %v933 = vsel %vm556, %v890, 0
        %v936 = vsel %vm556, %v891, 0
        %v939 = vsel %vm556, %v892, 0
        %v942 = vsel %vm556, %v893, 0
        %v945 = vsel %vm556, %v894, 0
        %v948 = vsel %vm556, %v895, 0
        %v951 = vsel %vm556, %v896, 0
        %v954 = vsel %vm556, %v897, 0
        %v957 = vsel %vm556, %v898, 0
        %v960 = vsel %vm556, %v899, 0
        %v963 = vsel %vm556, %v900, 0
        %v966 = vsel %vm556, %v901, 0
        %v969 = vsel %vm556, %v902, 0
        %v972 = vsel %vm556, %v903, 0
        %v975 = vsel %vm556, %v904, 0
        %v978 = vsel %vm556, %v905, 0
        %v981 = vsel %vm556, %v906, 0
        %v984 = vsel %vm556, %v907, 0
        %v987 = vsel %vm556, %v908, 0
        %v990 = vsel %vm556, %v909, 0
        %v993 = vsel %vm556, %v910, 0
        %v996 = vsel %vm556, %v911, 0
        %v999 = vsel %vm556, %v912, 0
        %v1002 = vsel %vm556, %v913, 0
        %v1005 = vsel %vm556, %v914, 0
        %v1008 = vsel %vm556, %v915, 0
        %v1011 = vsel %vm556, %v916, 0
        %v1014 = vsel %vm556, %v917, 0
        %v1017 = vsel %vm556, %v918, 0
        %v1020 = vsel %vm556, %v919, 0
        %v1023 = vsel %vm556, %v920, 0
        %1025 = vmatpush.msra.mxu0 0.0
        %1026 = vmatpush.msra.mxu0 0.0
        %1027 = vmatpush.msra.mxu0 0.0
        %1028 = vmatpush.msra.mxu0 0.0
        %1029 = vmatpush.msra.mxu0 0.0
        %1030 = vmatpush.msra.mxu0 0.0
        %1031 = vmatpush.msra.mxu0 0.0
        %1032 = vmatpush.msra.mxu0 0.0
        %1033 = vmatpush.msra.mxu0 0.0
        %1034 = vmatpush.msra.mxu0 0.0
        %1035 = vmatpush.msra.mxu0 0.0
        %1036 = vmatpush.msra.mxu0 0.0
        %1037 = vmatpush.msra.mxu0 %v924
        %1038 = vmatpush.msra.mxu0 %v923
        %1039 = vmatpush.msra.mxu0 %v922
        %1040 = vmatpush.msra.mxu0 %v921
        %1041 = vmatmul.f32.gmra.mxu0 %v930
        %v1042 = vpop.f32.mrf.mxu0
        %v1043 = vadd.f32 %v927, %v1042
        %1044 = vmatmul.f32.gmra.mxu0 %v933
        %v1045 = vpop.f32.mrf.mxu0
        %v1046 = vadd.f32 %v927, %v1045
        %1047 = vmatmul.f32.gmra.mxu0 %v936
        %v1048 = vpop.f32.mrf.mxu0
        %v1049 = vadd.f32 %v927, %v1048
        %1050 = vmatmul.f32.gmra.mxu0 %v939
        %v1051 = vpop.f32.mrf.mxu0
        %v1052 = vadd.f32 %v927, %v1051
        %1053 = vmatmul.f32.gmra.mxu0 %v942
        %v1054 = vpop.f32.mrf.mxu0
        %v1055 = vadd.f32 %v927, %v1054
        %1056 = vmatmul.f32.gmra.mxu0 %v945
        %v1057 = vpop.f32.mrf.mxu0
        %v1058 = vadd.f32 %v927, %v1057
        %1059 = vmatmul.f32.gmra.mxu0 %v948
        %v1060 = vpop.f32.mrf.mxu0
        %v1061 = vadd.f32 %v927, %v1060
        %1062 = vmatmul.f32.gmra.mxu0 %v951
        %v1063 = vpop.f32.mrf.mxu0
        %v1064 = vadd.f32 %v927, %v1063
        %1065 = vmatmul.f32.gmra.mxu0 %v954
        %v1066 = vpop.f32.mrf.mxu0
        %v1067 = vadd.f32 %v927, %v1066
        %1068 = vmatmul.f32.gmra.mxu0 %v957
        %v1069 = vpop.f32.mrf.mxu0
        %v1070 = vadd.f32 %v927, %v1069
        %1071 = vmatmul.f32.gmra.mxu0 %v960
        %v1072 = vpop.f32.mrf.mxu0
        %v1073 = vadd.f32 %v927, %v1072
        %1074 = vmatmul.f32.gmra.mxu0 %v963
        %v1075 = vpop.f32.mrf.mxu0
        %v1076 = vadd.f32 %v927, %v1075
        %1077 = vmatmul.f32.gmra.mxu0 %v966
        %v1078 = vpop.f32.mrf.mxu0
        %v1079 = vadd.f32 %v927, %v1078
        %1080 = vmatmul.f32.gmra.mxu0 %v969
        %v1081 = vpop.f32.mrf.mxu0
        %v1082 = vadd.f32 %v927, %v1081
        %1083 = vmatmul.f32.gmra.mxu0 %v972
        %v1084 = vpop.f32.mrf.mxu0
        %v1085 = vadd.f32 %v927, %v1084
        %1086 = vmatmul.f32.gmra.mxu0 %v975
        %v1087 = vpop.f32.mrf.mxu0
        %v1088 = vadd.f32 %v927, %v1087
        %1089 = vmatmul.f32.gmra.mxu0 %v978
        %v1090 = vpop.f32.mrf.mxu0
        %v1091 = vadd.f32 %v927, %v1090
        %1092 = vmatmul.f32.gmra.mxu0 %v981
        %v1093 = vpop.f32.mrf.mxu0
        %v1094 = vadd.f32 %v927, %v1093
        %1095 = vmatmul.f32.gmra.mxu0 %v984
        %v1096 = vpop.f32.mrf.mxu0
        %v1097 = vadd.f32 %v927, %v1096
        %1098 = vmatmul.f32.gmra.mxu0 %v987
        %v1099 = vpop.f32.mrf.mxu0
        %v1100 = vadd.f32 %v927, %v1099
        %1101 = vmatmul.f32.gmra.mxu0 %v990
        %v1102 = vpop.f32.mrf.mxu0
        %v1103 = vadd.f32 %v927, %v1102
        %1104 = vmatmul.f32.gmra.mxu0 %v993
        %v1105 = vpop.f32.mrf.mxu0
        %v1106 = vadd.f32 %v927, %v1105
        %1107 = vmatmul.f32.gmra.mxu0 %v996
        %v1108 = vpop.f32.mrf.mxu0
        %v1109 = vadd.f32 %v927, %v1108
        %1110 = vmatmul.f32.gmra.mxu0 %v999
        %v1111 = vpop.f32.mrf.mxu0
        %v1112 = vadd.f32 %v927, %v1111
        %1113 = vmatmul.f32.gmra.mxu0 %v1002
        %v1114 = vpop.f32.mrf.mxu0
        %v1115 = vadd.f32 %v927, %v1114
        %1116 = vmatmul.f32.gmra.mxu0 %v1005
        %v1117 = vpop.f32.mrf.mxu0
        %v1118 = vadd.f32 %v927, %v1117
        %1119 = vmatmul.f32.gmra.mxu0 %v1008
        %v1120 = vpop.f32.mrf.mxu0
        %v1121 = vadd.f32 %v927, %v1120
        %1122 = vmatmul.f32.gmra.mxu0 %v1011
        %v1123 = vpop.f32.mrf.mxu0
        %v1124 = vadd.f32 %v927, %v1123
        %1125 = vmatmul.f32.gmra.mxu0 %v1014
        %v1126 = vpop.f32.mrf.mxu0
        %v1127 = vadd.f32 %v927, %v1126
        %1128 = vmatmul.f32.gmra.mxu0 %v1017
        %v1129 = vpop.f32.mrf.mxu0
        %v1130 = vadd.f32 %v927, %v1129
        %1131 = vmatmul.f32.gmra.mxu0 %v1020
        %v1132 = vpop.f32.mrf.mxu0
        %v1133 = vadd.f32 %v927, %v1132
        %1134 = vmatmul.f32.gmra.mxu0 %v1023
        %v1135 = vpop.f32.mrf.mxu0
        %v1136 = vadd.f32 %v927, %v1135
        %1137 = vdwg.mxu0
        %v1138 = vtanh.pop %v1043
        %v1139 = vtanh.pop %v1046
        %v1140 = vtanh.pop %v1049
        %v1141 = vtanh.pop %v1052
        %v1142 = vtanh.pop %v1055
        %v1143 = vtanh.pop %v1058
        %v1144 = vtanh.pop %v1061
        %v1145 = vtanh.pop %v1064
        %v1146 = vtanh.pop %v1067
        %v1147 = vtanh.pop %v1070
        %v1148 = vtanh.pop %v1073
        %v1149 = vtanh.pop %v1076
        %v1150 = vtanh.pop %v1079
        %v1151 = vtanh.pop %v1082
        %v1152 = vtanh.pop %v1085
        %v1153 = vtanh.pop %v1088
        %v1154 = vtanh.pop %v1091
        %v1155 = vtanh.pop %v1094
        %v1156 = vtanh.pop %v1097
        %v1157 = vtanh.pop %v1100
        %v1158 = vtanh.pop %v1103
        %v1159 = vtanh.pop %v1106
        %v1160 = vtanh.pop %v1109
        %v1161 = vtanh.pop %v1112
        %v1162 = vtanh.pop %v1115
        %v1163 = vtanh.pop %v1118
        %v1164 = vtanh.pop %v1121
        %v1165 = vtanh.pop %v1124
        %v1166 = vtanh.pop %v1127
        %v1167 = vtanh.pop %v1130
        %v1168 = vtanh.pop %v1133
        %v1169 = vtanh.pop %v1136
        %v1170 = vld [vmem:[%s12] sm:$0xff]
        %v1171 = vld [vmem:[%s12 + $0x8] sm:$0xff]
        %v1172 = vld [vmem:[%s12 + $0x10] sm:$0xff]
        %v1173 = vld [vmem:[%s12 + $0x18] sm:$0xff]
        %v1174 = vld [vmem:[%s12 + $0x20] sm:$0xff]
        %v1175 = vld [vmem:[%s12 + $0x28] sm:$0xff]
        %v1176 = vld [vmem:[%s12 + $0x30] sm:$0xff]
        %v1177 = vld [vmem:[%s12 + $0x38] sm:$0xff]
        %v1178 = vld [vmem:[%s13] sm:$0x3]
        %v1180 = vperm.slane %v1178, 0
        %v1181 = vperm.slane %v1178, 1
        %v1185 = vsel %vm556, %v1138, 0
        %v1188 = vsel %vm556, %v1139, 0
        %v1191 = vsel %vm556, %v1140, 0
        %v1194 = vsel %vm556, %v1141, 0
        %v1197 = vsel %vm556, %v1142, 0
        %v1200 = vsel %vm556, %v1143, 0
        %v1203 = vsel %vm556, %v1144, 0
        %v1206 = vsel %vm556, %v1145, 0
        %v1209 = vsel %vm556, %v1146, 0
        %v1212 = vsel %vm556, %v1147, 0
        %v1215 = vsel %vm556, %v1148, 0
        %v1218 = vsel %vm556, %v1149, 0
        %v1221 = vsel %vm556, %v1150, 0
        %v1224 = vsel %vm556, %v1151, 0
        %v1227 = vsel %vm556, %v1152, 0
        %v1230 = vsel %vm556, %v1153, 0
        %v1233 = vsel %vm556, %v1154, 0
        %v1236 = vsel %vm556, %v1155, 0
        %v1239 = vsel %vm556, %v1156, 0
        %v1242 = vsel %vm556, %v1157, 0
        %v1245 = vsel %vm556, %v1158, 0
        %v1248 = vsel %vm556, %v1159, 0
        %v1251 = vsel %vm556, %v1160, 0
        %v1254 = vsel %vm556, %v1161, 0
        %v1257 = vsel %vm556, %v1162, 0
        %v1260 = vsel %vm556, %v1163, 0
        %v1263 = vsel %vm556, %v1164, 0
        %v1266 = vsel %vm556, %v1165, 0
        %v1269 = vsel %vm556, %v1166, 0
        %v1272 = vsel %vm556, %v1167, 0
        %v1275 = vsel %vm556, %v1168, 0
        %v1278 = vsel %vm556, %v1169, 0
        %1280 = vmatpush.msra.mxu0 0.0
        %1281 = vmatpush.msra.mxu0 0.0
        %1282 = vmatpush.msra.mxu0 0.0
        %1283 = vmatpush.msra.mxu0 0.0
        %1284 = vmatpush.msra.mxu0 0.0
        %1285 = vmatpush.msra.mxu0 0.0
        %1286 = vmatpush.msra.mxu0 0.0
        %1287 = vmatpush.msra.mxu0 0.0
        %1288 = vmatpush.msra.mxu0 0.0
        %1289 = vmatpush.msra.mxu0 0.0
        %1290 = vmatpush.msra.mxu0 0.0
        %1291 = vmatpush.msra.mxu0 0.0
        %1292 = vmatpush.msra.mxu0 %v1176
        %1293 = vmatpush.msra.mxu0 %v1174
        %1294 = vmatpush.msra.mxu0 %v1172
        %1295 = vmatpush.msra.mxu0 %v1170
        %1296 = vmatmul.f32.gmra.mxu0 %v1185
        %v1297 = vpop.f32.mrf.mxu0
        %v1298 = vadd.f32 %v1180, %v1297
        %1299 = vmatmul.f32.gmra.mxu0 %v1188
        %v1300 = vpop.f32.mrf.mxu0
        %v1301 = vadd.f32 %v1180, %v1300
        %1302 = vmatmul.f32.gmra.mxu0 %v1191
        %v1303 = vpop.f32.mrf.mxu0
        %v1304 = vadd.f32 %v1180, %v1303
        %1305 = vmatmul.f32.gmra.mxu0 %v1194
        %v1306 = vpop.f32.mrf.mxu0
        %v1307 = vadd.f32 %v1180, %v1306
        %1308 = vmatmul.f32.gmra.mxu0 %v1197
        %v1309 = vpop.f32.mrf.mxu0
        %v1310 = vadd.f32 %v1180, %v1309
        %1311 = vmatmul.f32.gmra.mxu0 %v1200
        %v1312 = vpop.f32.mrf.mxu0
        %v1313 = vadd.f32 %v1180, %v1312
        %1314 = vmatmul.f32.gmra.mxu0 %v1203
        %v1315 = vpop.f32.mrf.mxu0
        %v1316 = vadd.f32 %v1180, %v1315
        %1317 = vmatmul.f32.gmra.mxu0 %v1206
        %v1318 = vpop.f32.mrf.mxu0
        %v1319 = vadd.f32 %v1180, %v1318
        %1320 = vmatmul.f32.gmra.mxu0 %v1209
        %v1321 = vpop.f32.mrf.mxu0
        %v1322 = vadd.f32 %v1180, %v1321
        %1323 = vmatmul.f32.gmra.mxu0 %v1212
        %v1324 = vpop.f32.mrf.mxu0
        %v1325 = vadd.f32 %v1180, %v1324
        %1326 = vmatmul.f32.gmra.mxu0 %v1215
        %v1327 = vpop.f32.mrf.mxu0
        %v1328 = vadd.f32 %v1180, %v1327
        %1329 = vmatmul.f32.gmra.mxu0 %v1218
        %v1330 = vpop.f32.mrf.mxu0
        %v1331 = vadd.f32 %v1180, %v1330
        %1332 = vmatmul.f32.gmra.mxu0 %v1221
        %v1333 = vpop.f32.mrf.mxu0
        %v1334 = vadd.f32 %v1180, %v1333
        %1335 = vmatmul.f32.gmra.mxu0 %v1224
        %v1336 = vpop.f32.mrf.mxu0
        %v1337 = vadd.f32 %v1180, %v1336
        %1338 = vmatmul.f32.gmra.mxu0 %v1227
        %v1339 = vpop.f32.mrf.mxu0
        %v1340 = vadd.f32 %v1180, %v1339
        %1341 = vmatmul.f32.gmra.mxu0 %v1230
        %v1342 = vpop.f32.mrf.mxu0
        %v1343 = vadd.f32 %v1180, %v1342
        %1344 = vmatmul.f32.gmra.mxu0 %v1233
        %v1345 = vpop.f32.mrf.mxu0
        %v1346 = vadd.f32 %v1180, %v1345
        %1347 = vmatmul.f32.gmra.mxu0 %v1236
        %v1348 = vpop.f32.mrf.mxu0
        %v1349 = vadd.f32 %v1180, %v1348
        %1350 = vmatmul.f32.gmra.mxu0 %v1239
        %v1351 = vpop.f32.mrf.mxu0
        %v1352 = vadd.f32 %v1180, %v1351
        %1353 = vmatmul.f32.gmra.mxu0 %v1242
        %v1354 = vpop.f32.mrf.mxu0
        %v1355 = vadd.f32 %v1180, %v1354
        %1356 = vmatmul.f32.gmra.mxu0 %v1245
        %v1357 = vpop.f32.mrf.mxu0
        %v1358 = vadd.f32 %v1180, %v1357
        %1359 = vmatmul.f32.gmra.mxu0 %v1248
        %v1360 = vpop.f32.mrf.mxu0
        %v1361 = vadd.f32 %v1180, %v1360
        %1362 = vmatmul.f32.gmra.mxu0 %v1251
        %v1363 = vpop.f32.mrf.mxu0
        %v1364 = vadd.f32 %v1180, %v1363
        %1365 = vmatmul.f32.gmra.mxu0 %v1254
        %v1366 = vpop.f32.mrf.mxu0
        %v1367 = vadd.f32 %v1180, %v1366
        %1368 = vmatmul.f32.gmra.mxu0 %v1257
        %v1369 = vpop.f32.mrf.mxu0
        %v1370 = vadd.f32 %v1180, %v1369
        %1371 = vmatmul.f32.gmra.mxu0 %v1260
        %v1372 = vpop.f32.mrf.mxu0
        %v1373 = vadd.f32 %v1180, %v1372
        %1374 = vmatmul.f32.gmra.mxu0 %v1263
        %v1375 = vpop.f32.mrf.mxu0
        %v1376 = vadd.f32 %v1180, %v1375
        %1377 = vmatmul.f32.gmra.mxu0 %v1266
        %v1378 = vpop.f32.mrf.mxu0
        %v1379 = vadd.f32 %v1180, %v1378
        %1380 = vmatmul.f32.gmra.mxu0 %v1269
        %v1381 = vpop.f32.mrf.mxu0
        %v1382 = vadd.f32 %v1180, %v1381
        %1383 = vmatmul.f32.gmra.mxu0 %v1272
        %v1384 = vpop.f32.mrf.mxu0
        %v1385 = vadd.f32 %v1180, %v1384
        %1386 = vmatmul.f32.gmra.mxu0 %v1275
        %v1387 = vpop.f32.mrf.mxu0
        %v1388 = vadd.f32 %v1180, %v1387
        %1389 = vmatmul.f32.gmra.mxu0 %v1278
        %v1390 = vpop.f32.mrf.mxu0
        %v1391 = vadd.f32 %v1180, %v1390
        %1392 = vdwg.mxu0
        %1393 = vmatpush.msra.mxu0 0.0
        %1394 = vmatpush.msra.mxu0 0.0
        %1395 = vmatpush.msra.mxu0 0.0
        %1396 = vmatpush.msra.mxu0 0.0
        %1397 = vmatpush.msra.mxu0 0.0
        %1398 = vmatpush.msra.mxu0 0.0
        %1399 = vmatpush.msra.mxu0 0.0
        %1400 = vmatpush.msra.mxu0 0.0
        %1401 = vmatpush.msra.mxu0 0.0
        %1402 = vmatpush.msra.mxu0 0.0
        %1403 = vmatpush.msra.mxu0 0.0
        %1404 = vmatpush.msra.mxu0 0.0
        %1405 = vmatpush.msra.mxu0 %v1177
        %1406 = vmatpush.msra.mxu0 %v1175
        %1407 = vmatpush.msra.mxu0 %v1173
        %1408 = vmatpush.msra.mxu0 %v1171
        %1409 = vmatmul.f32.gmra.mxu0 %v1185
        %v1410 = vpop.f32.mrf.mxu0
        %v1411 = vadd.f32 %v1181, %v1410
        %1412 = vmatmul.f32.gmra.mxu0 %v1188
        %v1413 = vpop.f32.mrf.mxu0
        %v1414 = vadd.f32 %v1181, %v1413
        %1415 = vmatmul.f32.gmra.mxu0 %v1191
        %v1416 = vpop.f32.mrf.mxu0
        %v1417 = vadd.f32 %v1181, %v1416
        %1418 = vmatmul.f32.gmra.mxu0 %v1194
        %v1419 = vpop.f32.mrf.mxu0
        %v1420 = vadd.f32 %v1181, %v1419
        %1421 = vmatmul.f32.gmra.mxu0 %v1197
        %v1422 = vpop.f32.mrf.mxu0
        %v1423 = vadd.f32 %v1181, %v1422
        %1424 = vmatmul.f32.gmra.mxu0 %v1200
        %v1425 = vpop.f32.mrf.mxu0
        %v1426 = vadd.f32 %v1181, %v1425
        %1427 = vmatmul.f32.gmra.mxu0 %v1203
        %v1428 = vpop.f32.mrf.mxu0
        %v1429 = vadd.f32 %v1181, %v1428
        %1430 = vmatmul.f32.gmra.mxu0 %v1206
        %v1431 = vpop.f32.mrf.mxu0
        %v1432 = vadd.f32 %v1181, %v1431
        %1433 = vmatmul.f32.gmra.mxu0 %v1209
        %v1434 = vpop.f32.mrf.mxu0
        %v1435 = vadd.f32 %v1181, %v1434
        %1436 = vmatmul.f32.gmra.mxu0 %v1212
        %v1437 = vpop.f32.mrf.mxu0
        %v1438 = vadd.f32 %v1181, %v1437
        %1439 = vmatmul.f32.gmra.mxu0 %v1215
        %v1440 = vpop.f32.mrf.mxu0
        %v1441 = vadd.f32 %v1181, %v1440
        %1442 = vmatmul.f32.gmra.mxu0 %v1218
        %v1443 = vpop.f32.mrf.mxu0
        %v1444 = vadd.f32 %v1181, %v1443
        %1445 = vmatmul.f32.gmra.mxu0 %v1221
        %v1446 = vpop.f32.mrf.mxu0
        %v1447 = vadd.f32 %v1181, %v1446
        %1448 = vmatmul.f32.gmra.mxu0 %v1224
        %v1449 = vpop.f32.mrf.mxu0
        %v1450 = vadd.f32 %v1181, %v1449
        %1451 = vmatmul.f32.gmra.mxu0 %v1227
        %v1452 = vpop.f32.mrf.mxu0
        %v1453 = vadd.f32 %v1181, %v1452
        %1454 = vmatmul.f32.gmra.mxu0 %v1230
        %v1455 = vpop.f32.mrf.mxu0
        %v1456 = vadd.f32 %v1181, %v1455
        %1457 = vmatmul.f32.gmra.mxu0 %v1233
        %v1458 = vpop.f32.mrf.mxu0
        %v1459 = vadd.f32 %v1181, %v1458
        %1460 = vmatmul.f32.gmra.mxu0 %v1236
        %v1461 = vpop.f32.mrf.mxu0
        %v1462 = vadd.f32 %v1181, %v1461
        %1463 = vmatmul.f32.gmra.mxu0 %v1239
        %v1464 = vpop.f32.mrf.mxu0
        %v1465 = vadd.f32 %v1181, %v1464
        %1466 = vmatmul.f32.gmra.mxu0 %v1242
        %v1467 = vpop.f32.mrf.mxu0
        %v1468 = vadd.f32 %v1181, %v1467
        %1469 = vmatmul.f32.gmra.mxu0 %v1245
        %v1470 = vpop.f32.mrf.mxu0
        %v1471 = vadd.f32 %v1181, %v1470
        %1472 = vmatmul.f32.gmra.mxu0 %v1248
        %v1473 = vpop.f32.mrf.mxu0
        %v1474 = vadd.f32 %v1181, %v1473
        %1475 = vmatmul.f32.gmra.mxu0 %v1251
        %v1476 = vpop.f32.mrf.mxu0
        %v1477 = vadd.f32 %v1181, %v1476
        %1478 = vmatmul.f32.gmra.mxu0 %v1254
        %v1479 = vpop.f32.mrf.mxu0
        %v1480 = vadd.f32 %v1181, %v1479
        %1481 = vmatmul.f32.gmra.mxu0 %v1257
        %v1482 = vpop.f32.mrf.mxu0
        %v1483 = vadd.f32 %v1181, %v1482
        %1484 = vmatmul.f32.gmra.mxu0 %v1260
        %v1485 = vpop.f32.mrf.mxu0
        %v1486 = vadd.f32 %v1181, %v1485
        %1487 = vmatmul.f32.gmra.mxu0 %v1263
        %v1488 = vpop.f32.mrf.mxu0
        %v1489 = vadd.f32 %v1181, %v1488
        %1490 = vmatmul.f32.gmra.mxu0 %v1266
        %v1491 = vpop.f32.mrf.mxu0
        %v1492 = vadd.f32 %v1181, %v1491
        %1493 = vmatmul.f32.gmra.mxu0 %v1269
        %v1494 = vpop.f32.mrf.mxu0
        %v1495 = vadd.f32 %v1181, %v1494
        %1496 = vmatmul.f32.gmra.mxu0 %v1272
        %v1497 = vpop.f32.mrf.mxu0
        %v1498 = vadd.f32 %v1181, %v1497
        %1499 = vmatmul.f32.gmra.mxu0 %v1275
        %v1500 = vpop.f32.mrf.mxu0
        %v1501 = vadd.f32 %v1181, %v1500
        %1502 = vmatmul.f32.gmra.mxu0 %v1278
        %v1503 = vpop.f32.mrf.mxu0
        %v1504 = vadd.f32 %v1181, %v1503
        %1505 = vdwg.mxu0
        %v1506 = vld [vmem:[%s14] sm:$0xff]
        %v1507 = vld [vmem:[%s14 + $0x8] sm:$0xff]
        %v1508 = vld [vmem:[%s14 + $0x10] sm:$0xff]
        %v1509 = vld [vmem:[%s14 + $0x18] sm:$0xff]
        %v1510 = vmul.f32 %v616, %v1506
        %v1511 = vmul.f32 %v636, %v1507
        %v1512 = vmul.f32 %v616, %v1508
        %v1513 = vmul.f32 %v636, %v1509
        %1514 = vmatpush.xpose.msra.mxu0 %v1343
        %1515 = vmatpush.xpose.msra.mxu0 %v1340
        %1516 = vmatpush.xpose.msra.mxu0 %v1337
        %1517 = vmatpush.xpose.msra.mxu0 %v1334
        %1518 = vmatpush.xpose.msra.mxu0 %v1331
        %1519 = vmatpush.xpose.msra.mxu0 %v1328
        %1520 = vmatpush.xpose.msra.mxu0 %v1325
        %1521 = vmatpush.xpose.msra.mxu0 %v1322
        %1522 = vmatpush.xpose.msra.mxu0 %v1319
        %1523 = vmatpush.xpose.msra.mxu0 %v1316
        %1524 = vmatpush.xpose.msra.mxu0 %v1313
        %1525 = vmatpush.xpose.msra.mxu0 %v1310
        %1526 = vmatpush.xpose.msra.mxu0 %v1307
        %1527 = vmatpush.xpose.msra.mxu0 %v1304
        %1528 = vmatpush.xpose.msra.mxu0 %v1301
        %1529 = vmatpush.xpose.msra.mxu0 %v1298
        %1530 = vmatmul.f32.gmra.mxu0 %v1510
        %v1531 = vpop.f32.mrf.mxu0
        %v1532 = vadd.f32 0.0, %v1531
        %1533 = vmatmul.f32.gmra.mxu0 %v1512
        %v1534 = vpop.f32.mrf.mxu0
        %v1535 = vadd.f32 0.0, %v1534
        %1536 = vdwg.mxu0
        %1537 = vmatpush.xpose.msra.mxu0 %v1456
        %1538 = vmatpush.xpose.msra.mxu0 %v1453
        %1539 = vmatpush.xpose.msra.mxu0 %v1450
        %1540 = vmatpush.xpose.msra.mxu0 %v1447
        %1541 = vmatpush.xpose.msra.mxu0 %v1444
        %1542 = vmatpush.xpose.msra.mxu0 %v1441
        %1543 = vmatpush.xpose.msra.mxu0 %v1438
        %1544 = vmatpush.xpose.msra.mxu0 %v1435
        %1545 = vmatpush.xpose.msra.mxu0 %v1432
        %1546 = vmatpush.xpose.msra.mxu0 %v1429
        %1547 = vmatpush.xpose.msra.mxu0 %v1426
        %1548 = vmatpush.xpose.msra.mxu0 %v1423
        %1549 = vmatpush.xpose.msra.mxu0 %v1420
        %1550 = vmatpush.xpose.msra.mxu0 %v1417
        %1551 = vmatpush.xpose.msra.mxu0 %v1414
        %1552 = vmatpush.xpose.msra.mxu0 %v1411
        %1553 = vmatmul.f32.gmra.mxu0 %v1511
        %v1554 = vpop.f32.mrf.mxu0
        %v1555 = vadd.f32 %v1532, %v1554
        %1556 = vmatmul.f32.gmra.mxu0 %v1513
        %v1557 = vpop.f32.mrf.mxu0
        %v1558 = vadd.f32 %v1535, %v1557
        %1559 = vdwg.mxu0
        %1560 = vmatpush.xpose.msra.mxu0 %v1391
        %1561 = vmatpush.xpose.msra.mxu0 %v1388
        %1562 = vmatpush.xpose.msra.mxu0 %v1385
        %1563 = vmatpush.xpose.msra.mxu0 %v1382
        %1564 = vmatpush.xpose.msra.mxu0 %v1379
        %1565 = vmatpush.xpose.msra.mxu0 %v1376
        %1566 = vmatpush.xpose.msra.mxu0 %v1373
        %1567 = vmatpush.xpose.msra.mxu0 %v1370
        %1568 = vmatpush.xpose.msra.mxu0 %v1367
        %1569 = vmatpush.xpose.msra.mxu0 %v1364
        %1570 = vmatpush.xpose.msra.mxu0 %v1361
        %1571 = vmatpush.xpose.msra.mxu0 %v1358
        %1572 = vmatpush.xpose.msra.mxu0 %v1355
        %1573 = vmatpush.xpose.msra.mxu0 %v1352
        %1574 = vmatpush.xpose.msra.mxu0 %v1349
        %1575 = vmatpush.xpose.msra.mxu0 %v1346
        %1576 = vmatmul.f32.gmra.mxu0 %v1510
        %v1577 = vpop.f32.mrf.mxu0
        %v1578 = vadd.f32 0.0, %v1577
        %1579 = vmatmul.f32.gmra.mxu0 %v1512
        %v1580 = vpop.f32.mrf.mxu0
        %v1581 = vadd.f32 0.0, %v1580
        %1582 = vdwg.mxu0
        %1583 = vmatpush.xpose.msra.mxu0 %v1504
        %1584 = vmatpush.xpose.msra.mxu0 %v1501
        %1585 = vmatpush.xpose.msra.mxu0 %v1498
        %1586 = vmatpush.xpose.msra.mxu0 %v1495
        %1587 = vmatpush.xpose.msra.mxu0 %v1492
        %1588 = vmatpush.xpose.msra.mxu0 %v1489
        %1589 = vmatpush.xpose.msra.mxu0 %v1486
        %1590 = vmatpush.xpose.msra.mxu0 %v1483
        %1591 = vmatpush.xpose.msra.mxu0 %v1480
        %1592 = vmatpush.xpose.msra.mxu0 %v1477
        %1593 = vmatpush.xpose.msra.mxu0 %v1474
        %1594 = vmatpush.xpose.msra.mxu0 %v1471
        %1595 = vmatpush.xpose.msra.mxu0 %v1468
        %1596 = vmatpush.xpose.msra.mxu0 %v1465
        %1597 = vmatpush.xpose.msra.mxu0 %v1462
        %1598 = vmatpush.xpose.msra.mxu0 %v1459
        %1599 = vmatmul.f32.gmra.mxu0 %v1511
        %v1600 = vpop.f32.mrf.mxu0
        %v1601 = vadd.f32 %v1578, %v1600
        %1602 = vmatmul.f32.gmra.mxu0 %v1513
        %v1603 = vpop.f32.mrf.mxu0
        %v1604 = vadd.f32 %v1581, %v1603
        %1605 = vdwg.mxu0
        %1606 = vst [vmem:[%s496] sm:$0xff] %v1555
        %1607 = vst [vmem:[%s496 + $0x8] sm:$0xff] %v1601
        %1608 = vst [vmem:[%s496 + $0x10] sm:$0xff] %v1558
        %1609 = vst [vmem:[%s496 + $0x18] sm:$0xff] %v1604
        %s1610 = sand.u32 %s354, 1
        %s1611 = sand.u32 %s354, 1
        %s1612 = smul.addr %s1611, 32
        %s1613 = scalar_lea.vmem [#allocation2], %s1612
        // Predicated region
        $region81: #{_lambda_.1} parent=79 // pred_check
          %p1614 = pneg %p364
        $region82: #{_lambda_.1} parent=79 // pred_check_branch
          %1616 = sbr.rel (%p1614) target = $region84
        $region83: #{_lambda_.1} parent=79 // pred_region
          %s1617 = smul.u32 2, %s26
          %s1618 = ssub.s32 3, %s1617
          %p1619 = scmp.lt.s32.totalorder %s1618, 2
          %s1620 = scalar_select %p1619, %s1618, 2
          %s1621 = smul.u32 16, %s1620
          %p1622 = scmp.ne.s32.totalorder 0, %s1621
          %s1623 = smul.addr %s1617, 8
          %s1624 = scalar_lea.vmem %s15, %s1623
          %s1625 = smul.u32 %s1620, 8
          // Predicated region
          $region85: #{_lambda_.1} parent=83 // pred_check
            %p1626 = pneg %p1622
          $region86: #{_lambda_.1} parent=83 // pred_check_branch
            %1628 = sbr.rel (%p1626) target = $region88
          $region87: #{_lambda_.1} parent=83 // pred_region
            %p1629 = scmp.lt.u32.totalorder %s1625, 8
            %p1630 = pneg %p1629
            // Predicated region
            $region89: #{_lambda_.1} parent=87 // pred_check
              _
            $region90: #{_lambda_.1} parent=87 // pred_check_branch
              %1632 = sbr.rel (%p1629) target = $region92
            $region91: #{_lambda_.1} parent=87 // pred_region
              %s1650 = sand.u32 %s1625, 7
              %p1651 = scmp.eq.s32.totalorder %s1650, 0
              // Predicated region
              $region104: #{_lambda_.1} parent=91 // pred_check
                %p1652 = pneg %p1651
              $region105: #{_lambda_.1} parent=91 // pred_check_branch
                %1654 = sbr.rel (%p1652) target = $region107
              $region106: #{_lambda_.1} parent=91 // pred_region
                %s1655 = sshrl.u32 %s1625, 3
                %s1656 = sshrl.u32 %s1655, 4
                // While loop
                $region108: #{_lambda_.1} parent=106 // loop_pre_header
                  _
                $region109: #{_lambda_.1} parent=106 // loop_header
                  %s1658 = sphi 0, %s1660
                  %p1659 = scmp.ge.s32.totalorder %s1658, %s1656
                  %s1663 = sphi 0, %s1732
                  %s1664 = sphi %s1613, %s1735
                  %s1665 = sphi %s1624, %s1736
                $region110: #{_lambda_.1} parent=106 // loop_header_branch
                  %1662 = sbr.rel (%p1659) target = $region114
                $region111: #{_lambda_.1} parent=106 // loop_body
                  %v1666 = vld [vmem:[%s1664] sm:$0xff]
                  %1667 = vst [vmem:[%s1665] sm:$0xff] %v1666
                  %v1668 = vld [vmem:[%s1664 + $0x8] sm:$0xff]
                  %1669 = vst [vmem:[%s1665 + $0x8] sm:$0xff] %v1668
                  %v1670 = vld [vmem:[%s1664 + $0x10] sm:$0xff]
                  %1671 = vst [vmem:[%s1665 + $0x10] sm:$0xff] %v1670
                  %v1672 = vld [vmem:[%s1664 + $0x18] sm:$0xff]
                  %1673 = vst [vmem:[%s1665 + $0x18] sm:$0xff] %v1672
                  %v1674 = vld [vmem:[%s1664 + $0x20] sm:$0xff]
                  %1675 = vst [vmem:[%s1665 + $0x20] sm:$0xff] %v1674
                  %v1676 = vld [vmem:[%s1664 + $0x28] sm:$0xff]
                  %1677 = vst [vmem:[%s1665 + $0x28] sm:$0xff] %v1676
                  %v1678 = vld [vmem:[%s1664 + $0x30] sm:$0xff]
                  %1679 = vst [vmem:[%s1665 + $0x30] sm:$0xff] %v1678
                  %v1680 = vld [vmem:[%s1664 + $0x38] sm:$0xff]
                  %1681 = vst [vmem:[%s1665 + $0x38] sm:$0xff] %v1680
                  %v1682 = vld [vmem:[%s1664 + $0x40] sm:$0xff]
                  %1683 = vst [vmem:[%s1665 + $0x40] sm:$0xff] %v1682
                  %v1684 = vld [vmem:[%s1664 + $0x48] sm:$0xff]
                  %1685 = vst [vmem:[%s1665 + $0x48] sm:$0xff] %v1684
                  %v1686 = vld [vmem:[%s1664 + $0x50] sm:$0xff]
                  %1687 = vst [vmem:[%s1665 + $0x50] sm:$0xff] %v1686
                  %v1688 = vld [vmem:[%s1664 + $0x58] sm:$0xff]
                  %1689 = vst [vmem:[%s1665 + $0x58] sm:$0xff] %v1688
                  %v1690 = vld [vmem:[%s1664 + $0x60] sm:$0xff]
                  %1691 = vst [vmem:[%s1665 + $0x60] sm:$0xff] %v1690
                  %v1692 = vld [vmem:[%s1664 + $0x68] sm:$0xff]
                  %1693 = vst [vmem:[%s1665 + $0x68] sm:$0xff] %v1692
                  %v1694 = vld [vmem:[%s1664 + $0x70] sm:$0xff]
                  %1695 = vst [vmem:[%s1665 + $0x70] sm:$0xff] %v1694
                  %v1696 = vld [vmem:[%s1664 + $0x78] sm:$0xff]
                  %1697 = vst [vmem:[%s1665 + $0x78] sm:$0xff] %v1696
                  %v1698 = vld [vmem:[%s1664 + $0x10] sm:$0xff]
                  %1699 = vst [vmem:[%s1665 + $0x18] sm:$0xff] %v1698
                  %v1700 = vld [vmem:[%s1664 + $0x18] sm:$0xff]
                  %1701 = vst [vmem:[%s1665 + $0x20] sm:$0xff] %v1700
                  %v1702 = vld [vmem:[%s1664 + $0x20] sm:$0xff]
                  %1703 = vst [vmem:[%s1665 + $0x28] sm:$0xff] %v1702
                  %v1704 = vld [vmem:[%s1664 + $0x28] sm:$0xff]
                  %1705 = vst [vmem:[%s1665 + $0x30] sm:$0xff] %v1704
                  %v1706 = vld [vmem:[%s1664 + $0x30] sm:$0xff]
                  %1707 = vst [vmem:[%s1665 + $0x38] sm:$0xff] %v1706
                  %v1708 = vld [vmem:[%s1664 + $0x38] sm:$0xff]
                  %1709 = vst [vmem:[%s1665 + $0x40] sm:$0xff] %v1708
                  %v1710 = vld [vmem:[%s1664 + $0x40] sm:$0xff]
                  %1711 = vst [vmem:[%s1665 + $0x48] sm:$0xff] %v1710
                  %v1712 = vld [vmem:[%s1664 + $0x48] sm:$0xff]
                  %1713 = vst [vmem:[%s1665 + $0x50] sm:$0xff] %v1712
                  %v1714 = vld [vmem:[%s1664 + $0x50] sm:$0xff]
                  %1715 = vst [vmem:[%s1665 + $0x58] sm:$0xff] %v1714
                  %v1716 = vld [vmem:[%s1664 + $0x58] sm:$0xff]
                  %1717 = vst [vmem:[%s1665 + $0x60] sm:$0xff] %v1716
                  %v1718 = vld [vmem:[%s1664 + $0x60] sm:$0xff]
                  %1719 = vst [vmem:[%s1665 + $0x68] sm:$0xff] %v1718
                  %v1720 = vld [vmem:[%s1664 + $0x68] sm:$0xff]
                  %1721 = vst [vmem:[%s1665 + $0x70] sm:$0xff] %v1720
                  %v1722 = vld [vmem:[%s1664 + $0x70] sm:$0xff]
                  %1723 = vst [vmem:[%s1665 + $0x78] sm:$0xff] %v1722
                  %v1724 = vld [vmem:[%s1664 + $0x78] sm:$0xff]
                  %1725 = vst [vmem:[%s1665 + $0x80] sm:$0xff] %v1724
                  %v1726 = vld [vmem:[%s1664 + $0x80] sm:$0xff]
                  %1727 = vst [vmem:[%s1665 + $0x88] sm:$0xff] %v1726
                  %v1728 = vld [vmem:[%s1664 + $0x88] sm:$0xff]
                  %1729 = vst [vmem:[%s1665 + $0x90] sm:$0xff] %v1728
                  %s1730 = sadd.s32 1, %s1663
                  %p1731 = scmp.ge.s32.totalorder %s1730, %s1656
                  %s1732 = scalar_select %p1731, 0, %s1730
                  %s1733 = smul.u32 %s1732, 128
                  %s1734 = smul.u32 %s1732, 128
                  %s1735 = scalar_lea.vmem %s1613, %s1733 [#allocation2]
                  %s1736 = scalar_lea.vmem %s1624, %s1734
                $region112: #{_lambda_.1} parent=106 // loop_footer
                  %s1660 = sadd.s32 %s1658, 1
                $region113: #{_lambda_.1} parent=106 // loop_footer_branch
                  %1657 = sbr.rel target = $region109
                $region114: #{_lambda_.1} parent=106 // loop_exit
                  _
                %s1737 = sshrl.u32 %s1655, 4
                %s1738 = sand.u32 %s1655, 15
                %s1739 = smul.u32 %s1737, 16
                %s1740 = smul.u32 8, %s1739
                %s1741 = scalar_lea.vmem %s1613, %s1740 [#allocation2]
                %s1742 = smul.u32 8, %s1739
                %s1743 = scalar_lea.vmem %s1624, %s1742
                // While loop
                $region115: #{_lambda_.1} parent=106 // loop_pre_header
                  _
                $region116: #{_lambda_.1} parent=106 // loop_header
                  %s1745 = sphi 0, %s1747
                  %p1746 = scmp.ge.s32.totalorder %s1745, %s1738
                  %s1750 = sphi 0, %s1759
                  %s1751 = sphi %s1741, %s1762
                  %s1752 = sphi %s1743, %s1763
                $region117: #{_lambda_.1} parent=106 // loop_header_branch
                  %1749 = sbr.rel (%p1746) target = $region121
                $region118: #{_lambda_.1} parent=106 // loop_body
                  %v1753 = vld [vmem:[%s1751] sm:$0xff]
                  %1754 = vst [vmem:[%s1752] sm:$0xff] %v1753
                  %v1755 = vld [vmem:[%s1751 + $0x10] sm:$0xff]
                  %1756 = vst [vmem:[%s1752 + $0x18] sm:$0xff] %v1755
                  %s1757 = sadd.s32 1, %s1750
                  %p1758 = scmp.ge.s32.totalorder %s1757, %s1738
                  %s1759 = scalar_select %p1758, 0, %s1757
                  %s1760 = smul.u32 %s1759, 8
                  %s1761 = smul.u32 %s1759, 8
                  %s1762 = scalar_lea.vmem %s1741, %s1760 [#allocation2]
                  %s1763 = scalar_lea.vmem %s1743, %s1761
                $region119: #{_lambda_.1} parent=106 // loop_footer
                  %s1747 = sadd.s32 %s1745, 1
                $region120: #{_lambda_.1} parent=106 // loop_footer_branch
                  %1744 = sbr.rel target = $region116
                $region121: #{_lambda_.1} parent=106 // loop_exit
                  _
              $region107: #{_lambda_.1} parent=91 // pred_fallthru
                _
              %p1764 = pneg %p1651
              // Predicated region
              $region122: #{_lambda_.1} parent=91 // pred_check
                _
              $region123: #{_lambda_.1} parent=91 // pred_check_branch
                %1766 = sbr.rel (%p1651) target = $region125
              $region124: #{_lambda_.1} parent=91 // pred_region
                %s1767 = sand.u32 %s1625, 7
                %s1768 = ssub.s32 %s1625, %s1767
                %s1769 = scalar_lea.vmem %s1613, %s1768 [#allocation2]
                %s1770 = ssub.s32 %s1625, %s1767
                %s1771 = scalar_lea.vmem %s1624, %s1770
                %s1772 = sshrl.u32 %s1625, 3
                %s1773 = sshrl.u32 %s1772, 4
                // While loop
                $region126: #{_lambda_.1} parent=124 // loop_pre_header
                  _
                $region127: #{_lambda_.1} parent=124 // loop_header
                  %s1775 = sphi 0, %s1777
                  %p1776 = scmp.ge.s32.totalorder %s1775, %s1773
                  %s1780 = sphi 0, %s1849
                  %s1781 = sphi %s1613, %s1852
                  %s1782 = sphi %s1624, %s1853
                $region128: #{_lambda_.1} parent=124 // loop_header_branch
                  %1779 = sbr.rel (%p1776) target = $region132
                $region129: #{_lambda_.1} parent=124 // loop_body
                  %v1783 = vld [vmem:[%s1781] sm:$0xff]
                  %1784 = vst [vmem:[%s1782] sm:$0xff] %v1783
                  %v1785 = vld [vmem:[%s1781 + $0x8] sm:$0xff]
                  %1786 = vst [vmem:[%s1782 + $0x8] sm:$0xff] %v1785
                  %v1787 = vld [vmem:[%s1781 + $0x10] sm:$0xff]
                  %1788 = vst [vmem:[%s1782 + $0x10] sm:$0xff] %v1787
                  %v1789 = vld [vmem:[%s1781 + $0x18] sm:$0xff]
                  %1790 = vst [vmem:[%s1782 + $0x18] sm:$0xff] %v1789
                  %v1791 = vld [vmem:[%s1781 + $0x20] sm:$0xff]
                  %1792 = vst [vmem:[%s1782 + $0x20] sm:$0xff] %v1791
                  %v1793 = vld [vmem:[%s1781 + $0x28] sm:$0xff]
                  %1794 = vst [vmem:[%s1782 + $0x28] sm:$0xff] %v1793
                  %v1795 = vld [vmem:[%s1781 + $0x30] sm:$0xff]
                  %1796 = vst [vmem:[%s1782 + $0x30] sm:$0xff] %v1795
                  %v1797 = vld [vmem:[%s1781 + $0x38] sm:$0xff]
                  %1798 = vst [vmem:[%s1782 + $0x38] sm:$0xff] %v1797
                  %v1799 = vld [vmem:[%s1781 + $0x40] sm:$0xff]
                  %1800 = vst [vmem:[%s1782 + $0x40] sm:$0xff] %v1799
                  %v1801 = vld [vmem:[%s1781 + $0x48] sm:$0xff]
                  %1802 = vst [vmem:[%s1782 + $0x48] sm:$0xff] %v1801
                  %v1803 = vld [vmem:[%s1781 + $0x50] sm:$0xff]
                  %1804 = vst [vmem:[%s1782 + $0x50] sm:$0xff] %v1803
                  %v1805 = vld [vmem:[%s1781 + $0x58] sm:$0xff]
                  %1806 = vst [vmem:[%s1782 + $0x58] sm:$0xff] %v1805
                  %v1807 = vld [vmem:[%s1781 + $0x60] sm:$0xff]
                  %1808 = vst [vmem:[%s1782 + $0x60] sm:$0xff] %v1807
                  %v1809 = vld [vmem:[%s1781 + $0x68] sm:$0xff]
                  %1810 = vst [vmem:[%s1782 + $0x68] sm:$0xff] %v1809
                  %v1811 = vld [vmem:[%s1781 + $0x70] sm:$0xff]
                  %1812 = vst [vmem:[%s1782 + $0x70] sm:$0xff] %v1811
                  %v1813 = vld [vmem:[%s1781 + $0x78] sm:$0xff]
                  %1814 = vst [vmem:[%s1782 + $0x78] sm:$0xff] %v1813
                  %v1815 = vld [vmem:[%s1781 + $0x10] sm:$0xff]
                  %1816 = vst [vmem:[%s1782 + $0x18] sm:$0xff] %v1815
                  %v1817 = vld [vmem:[%s1781 + $0x18] sm:$0xff]
                  %1818 = vst [vmem:[%s1782 + $0x20] sm:$0xff] %v1817
                  %v1819 = vld [vmem:[%s1781 + $0x20] sm:$0xff]
                  %1820 = vst [vmem:[%s1782 + $0x28] sm:$0xff] %v1819
                  %v1821 = vld [vmem:[%s1781 + $0x28] sm:$0xff]
                  %1822 = vst [vmem:[%s1782 + $0x30] sm:$0xff] %v1821
                  %v1823 = vld [vmem:[%s1781 + $0x30] sm:$0xff]
                  %1824 = vst [vmem:[%s1782 + $0x38] sm:$0xff] %v1823
                  %v1825 = vld [vmem:[%s1781 + $0x38] sm:$0xff]
                  %1826 = vst [vmem:[%s1782 + $0x40] sm:$0xff] %v1825
                  %v1827 = vld [vmem:[%s1781 + $0x40] sm:$0xff]
                  %1828 = vst [vmem:[%s1782 + $0x48] sm:$0xff] %v1827
                  %v1829 = vld [vmem:[%s1781 + $0x48] sm:$0xff]
                  %1830 = vst [vmem:[%s1782 + $0x50] sm:$0xff] %v1829
                  %v1831 = vld [vmem:[%s1781 + $0x50] sm:$0xff]
                  %1832 = vst [vmem:[%s1782 + $0x58] sm:$0xff] %v1831
                  %v1833 = vld [vmem:[%s1781 + $0x58] sm:$0xff]
                  %1834 = vst [vmem:[%s1782 + $0x60] sm:$0xff] %v1833
                  %v1835 = vld [vmem:[%s1781 + $0x60] sm:$0xff]
                  %1836 = vst [vmem:[%s1782 + $0x68] sm:$0xff] %v1835
                  %v1837 = vld [vmem:[%s1781 + $0x68] sm:$0xff]
                  %1838 = vst [vmem:[%s1782 + $0x70] sm:$0xff] %v1837
                  %v1839 = vld [vmem:[%s1781 + $0x70] sm:$0xff]
                  %1840 = vst [vmem:[%s1782 + $0x78] sm:$0xff] %v1839
                  %v1841 = vld [vmem:[%s1781 + $0x78] sm:$0xff]
                  %1842 = vst [vmem:[%s1782 + $0x80] sm:$0xff] %v1841
                  %v1843 = vld [vmem:[%s1781 + $0x80] sm:$0xff]
                  %1844 = vst [vmem:[%s1782 + $0x88] sm:$0xff] %v1843
                  %v1845 = vld [vmem:[%s1781 + $0x88] sm:$0xff]
                  %1846 = vst [vmem:[%s1782 + $0x90] sm:$0xff] %v1845
                  %s1847 = sadd.s32 1, %s1780
                  %p1848 = scmp.ge.s32.totalorder %s1847, %s1773
                  %s1849 = scalar_select %p1848, 0, %s1847
                  %s1850 = smul.u32 %s1849, 128
                  %s1851 = smul.u32 %s1849, 128
                  %s1852 = scalar_lea.vmem %s1613, %s1850 [#allocation2]
                  %s1853 = scalar_lea.vmem %s1624, %s1851
                $region130: #{_lambda_.1} parent=124 // loop_footer
                  %s1777 = sadd.s32 %s1775, 1
                $region131: #{_lambda_.1} parent=124 // loop_footer_branch
                  %1774 = sbr.rel target = $region127
                $region132: #{_lambda_.1} parent=124 // loop_exit
                  _
                %s1854 = sshrl.u32 %s1772, 4
                %s1855 = sand.u32 %s1772, 15
                %s1856 = smul.u32 %s1854, 16
                %s1857 = smul.u32 8, %s1856
                %s1858 = scalar_lea.vmem %s1613, %s1857 [#allocation2]
                %s1859 = smul.u32 8, %s1856
                %s1860 = scalar_lea.vmem %s1624, %s1859
                // While loop
                $region133: #{_lambda_.1} parent=124 // loop_pre_header
                  _
                $region134: #{_lambda_.1} parent=124 // loop_header
                  %s1862 = sphi 0, %s1864
                  %p1863 = scmp.ge.s32.totalorder %s1862, %s1855
                  %s1867 = sphi 0, %s1876
                  %s1868 = sphi %s1858, %s1879
                  %s1869 = sphi %s1860, %s1880
                $region135: #{_lambda_.1} parent=124 // loop_header_branch
                  %1866 = sbr.rel (%p1863) target = $region139
                $region136: #{_lambda_.1} parent=124 // loop_body
                  %v1870 = vld [vmem:[%s1868] sm:$0xff]
                  %1871 = vst [vmem:[%s1869] sm:$0xff] %v1870
                  %v1872 = vld [vmem:[%s1868 + $0x10] sm:$0xff]
                  %1873 = vst [vmem:[%s1869 + $0x18] sm:$0xff] %v1872
                  %s1874 = sadd.s32 1, %s1867
                  %p1875 = scmp.ge.s32.totalorder %s1874, %s1855
                  %s1876 = scalar_select %p1875, 0, %s1874
                  %s1877 = smul.u32 %s1876, 8
                  %s1878 = smul.u32 %s1876, 8
                  %s1879 = scalar_lea.vmem %s1858, %s1877 [#allocation2]
                  %s1880 = scalar_lea.vmem %s1860, %s1878
                $region137: #{_lambda_.1} parent=124 // loop_footer
                  %s1864 = sadd.s32 %s1862, 1
                $region138: #{_lambda_.1} parent=124 // loop_footer_branch
                  %1861 = sbr.rel target = $region134
                $region139: #{_lambda_.1} parent=124 // loop_exit
                  _
                %s1881 = sshll.u32 1, %s1767
                %s1882 = ssub.s32 %s1881, 1
                loop: start=0, step=1, limit=1
                $region140: #{_lambda_.1} parent=124 // loop_pre_header
                  _
                $region141: #{_lambda_.1} parent=124 // loop_header
                  %s1884 = sphi 0, %s1888
                  %p1885 = scmp.ge.s32.totalorder %s1884, 1
                  %s1889 = sphi %s1769, %s1769
                  %s1890 = sphi %s1771, %s1771
                $region142: #{_lambda_.1} parent=124 // loop_header_branch
                  %1887 = sbr.rel (%p1885) target = $region146
                $region143: #{_lambda_.1} parent=124 // loop_body
                  %v1891 = vld [vmem:[%s1889] sm:%s1882]
                  %1892 = vst [vmem:[%s1890] sm:%s1882] %v1891
                  %v1893 = vld [vmem:[%s1889 + $0x10] sm:%s1882]
                  %1894 = vst [vmem:[%s1890 + $0x18] sm:%s1882] %v1893
                $region144: #{_lambda_.1} parent=124 // loop_footer
                  %s1888 = sadd.s32 1, %s1884
                $region145: #{_lambda_.1} parent=124 // loop_footer_branch
                  %1883 = sbr.rel target = $region141
                $region146: #{_lambda_.1} parent=124 // loop_exit
                  _
              $region125: #{_lambda_.1} parent=91 // pred_fallthru
                _
            $region92: #{_lambda_.1} parent=87 // pred_fallthru
              _
            // Predicated region
            $region93: #{_lambda_.1} parent=87 // pred_check
              %p1633 = pneg %p1629
            $region94: #{_lambda_.1} parent=87 // pred_check_branch
              %1635 = sbr.rel (%p1633) target = $region96
            $region95: #{_lambda_.1} parent=87 // pred_region
              %s1636 = sshll.u32 1, %s1625
              %s1637 = ssub.s32 %s1636, 1
              loop: start=0, step=1, limit=1
              $region97: #{_lambda_.1} parent=95 // loop_pre_header
                _
              $region98: #{_lambda_.1} parent=95 // loop_header
                %s1639 = sphi 0, %s1643
                %p1640 = scmp.ge.s32.totalorder %s1639, 1
                %s1644 = sphi %s1613, %s1613
                %s1645 = sphi %s1624, %s1624
              $region99: #{_lambda_.1} parent=95 // loop_header_branch
                %1642 = sbr.rel (%p1640) target = $region103
              $region100: #{_lambda_.1} parent=95 // loop_body
                %v1646 = vld [vmem:[%s1644] sm:%s1637]
                %1647 = vst [vmem:[%s1645] sm:%s1637] %v1646
                %v1648 = vld [vmem:[%s1644 + $0x10] sm:%s1637]
                %1649 = vst [vmem:[%s1645 + $0x18] sm:%s1637] %v1648
              $region101: #{_lambda_.1} parent=95 // loop_footer
                %s1643 = sadd.s32 1, %s1639
              $region102: #{_lambda_.1} parent=95 // loop_footer_branch
                %1638 = sbr.rel target = $region98
              $region103: #{_lambda_.1} parent=95 // loop_exit
                _
            $region96: #{_lambda_.1} parent=87 // pred_fallthru
              _
          $region88: #{_lambda_.1} parent=83 // pred_fallthru
            _
          %1895 = vnop
        $region84: #{_lambda_.1} parent=79 // pred_fallthru
          _
      $region80: #{_lambda_.1} parent=5 // pred_fallthru
        _
      %p1896 = scmp.le.s32.totalorder 2, %s21
      // Predicated region
      $region147: #{_lambda_.1} parent=5 // pred_check
        %p1897 = pneg %p1896
      $region148: #{_lambda_.1} parent=5 // pred_check_branch
        %1899 = sbr.rel (%p1897) target = $region150
      $region149: #{_lambda_.1} parent=5 // pred_region
        %s1900 = ssub.s32 %s21, 2
        // Predicated region
        $region151: #{_lambda_.1} parent=149 // pred_check
          %p1901 = pneg %p370
        $region152: #{_lambda_.1} parent=149 // pred_check_branch
          %1903 = sbr.rel (%p1901) target = $region154
        $region153: #{_lambda_.1} parent=149 // pred_region
          %s1904 = sand.u32 %s355, 1
          %s1905 = sand.u32 %s355, 1
          %s1906 = smul.addr %s1905, 32
          %s1907 = scalar_lea.vmem [#allocation2], %s1906
        $region154: #{_lambda_.1} parent=149 // pred_fallthru
          _
      $region150: #{_lambda_.1} parent=5 // pred_fallthru
        _
    $region6: #{_lambda_.1} parent=1 // loop_footer
      %s25 = sadd.s32 1, %s21
    $region7: #{_lambda_.1} parent=1 // loop_footer_branch
      %20 = sbr.rel target = $region3
    $region8: #{_lambda_.1} parent=1 // loop_exit
      _

</llo_original>
